<compile_context>
chip_gen: v5e
topology: v5e:2x2
jax: 0.10.0
libtpu: 0.0.40
codegen_flags: <defaults>
</compile_context>

<pallas_src>
import functools

import jax
import jax.numpy as jnp
from jax.experimental import pallas as pl
from jax.experimental.pallas import tpu as pltpu


def _round_up(x: int, m: int) -> int:
    return ((x + m - 1) // m) * m


def decoder_kernel(z_ref, w1_ref, b1_ref, w2_ref, b2_ref, out_ref):
    # fc1 + relu  (MXU matmul, f32 accumulation)
    h = jnp.dot(z_ref[...], w1_ref[...], preferred_element_type=jnp.float32)
    h = jnp.maximum(h + b1_ref[...], 0.0)
    # fc2 + sigmoid (EUP handles the exp)
    y = jnp.dot(h, w2_ref[...], preferred_element_type=jnp.float32)
    out_ref[...] = jax.nn.sigmoid(y + b2_ref[...]).astype(out_ref.dtype)


def prepare_params(w1t, b1, w2t, b2):
    """Pad the hidden (lane) dim to a multiple of 128 ONCE, at init time.

    w1t: (latent, hidden), b1: (1, hidden), w2t: (hidden, output), b2: (1, output).
    Zero padding is numerically exact: padded hidden columns produce
    relu(0 + 0) = 0 activations, and the matching zero rows of w2 contribute
    nothing to the output.  The output dim is left unpadded (see kernel notes).
    """
    hidden_dim = w1t.shape[1]
    hid_p = _round_up(hidden_dim, 128)
    w1_p = jnp.pad(w1t, ((0, 0), (0, hid_p - hidden_dim)))
    b1_p = jnp.pad(b1, ((0, 0), (0, hid_p - hidden_dim)))
    w2_p = jnp.pad(w2t, ((0, hid_p - hidden_dim), (0, 0)))
    return w1_p, b1_p, w2_p, b2


def _choose_batch_tile(batch: int, max_tile: int = 512, target_steps: int = 2):
    """Pick a batch tile that (a) is a multiple of 8 (sublane), (b) gives at
    least `target_steps` grid steps when possible (so v7x's two TensorCores are
    both used), and (c) is capped at `max_tile` (VMEM-safe on v5e)."""
    tile = _round_up(max(1, -(-batch // target_steps)), 8)
    tile = min(tile, max_tile)
    return tile, _round_up(batch, tile)


@functools.partial(jax.jit, static_argnames=("max_tile",))
def decoder_forward(z, w1_p, b1_p, w2_p, b2, *, max_tile=512):
    """z: (B, latent); pre-padded params from `prepare_params` -> (B, output) f32."""
    B, latent_dim = z.shape
    hid_p = w1_p.shape[1]
    output_dim = w2_p.shape[1]

    batch_tile, b_p = _choose_batch_tile(B, max_tile=max_tile)
    grid = (b_p // batch_tile,)

    # Only the activations are padded per call (cheap; fused under jit).
    z_p = jnp.pad(z, ((0, b_p - B), (0, 0)))

    # Advisory cost estimate using the padded shapes that actually execute.
    cost = pl.CostEstimate(
        flops=2 * b_p * (latent_dim * hid_p + hid_p * output_dim),
        transcendentals=b_p * output_dim,  # one exp per (padded) output element
        bytes_accessed=4 * (z_p.size + b_p * output_dim
                            + w1_p.size + b1_p.size + w2_p.size + b2.size),
    )

    out_padded = pl.pallas_call(
        decoder_kernel,
        out_shape=jax.ShapeDtypeStruct((b_p, output_dim), jnp.float32),
        grid_spec=pltpu.PrefetchScalarGridSpec(
            num_scalar_prefetch=0,
            grid=grid,
            in_specs=[
                # per-grid-step batch tile of z (lane dim == full latent dim)
                pl.BlockSpec((batch_tile, latent_dim), lambda i: (i, 0)),
                # weights / biases: full arrays, constant block -> VMEM-resident
                pl.BlockSpec((latent_dim, hid_p), lambda i: (0, 0)),
                pl.BlockSpec((1, hid_p), lambda i: (0, 0)),
                pl.BlockSpec((hid_p, output_dim), lambda i: (0, 0)),
                pl.BlockSpec((1, output_dim), lambda i: (0, 0)),
            ],
            # last dim == full array dim (784) is legal; avoids an extra
            # HBM copy to strip lane padding afterwards.
            out_specs=pl.BlockSpec((batch_tile, output_dim), lambda i: (i, 0)),
        ),
        compiler_params=pltpu.CompilerParams(
            dimension_semantics=("parallel",),
        ),
        cost_estimate=cost,
    )(z_p, w1_p, b1_p, w2_p, b2)

    # Only the (small) batch padding needs slicing away; no-op when b_p == B.
    return out_padded[:B, :]


def init_params(key, latent_dim=20, hidden_dim=400, output_dim=784):
    """Deterministic init mimicking nn.Linear's uniform(-1/sqrt(in), 1/sqrt(in)).
    Weights stored pre-transposed as (in_features, out_features)."""
    k1, k2, k3, k4 = jax.random.split(key, 4)
    bound1 = 1.0 / (latent_dim ** 0.5)
    bound2 = 1.0 / (hidden_dim ** 0.5)
    w1t = jax.random.uniform(k1, (latent_dim, hidden_dim), jnp.float32, -bound1, bound1)
    b1 = jax.random.uniform(k2, (1, hidden_dim), jnp.float32, -bound1, bound1)
    w2t = jax.random.uniform(k3, (hidden_dim, output_dim), jnp.float32, -bound2, bound2)
    b2 = jax.random.uniform(k4, (1, output_dim), jnp.float32, -bound2, bound2)
    return w1t, b1, w2t, b2


if __name__ == "__main__":
    latent_dim, hidden_dim, output_dim = 20, 400, 784
    batch = 100  # not a multiple of 8: exercises the padding + 2-step grid path

    key = jax.random.PRNGKey(0)
    kz, kp = jax.random.split(key)
    z = jax.random.normal(kz, (batch, latent_dim), jnp.float32)
    w1t, b1, w2t, b2 = init_params(kp, latent_dim, hidden_dim, output_dim)

    # Pad weights once (hoisted out of the forward pass).
    params_padded = prepare_params(w1t, b1, w2t, b2)

    out = decoder_forward(z, *params_padded)
    out = jax.block_until_ready(out)

    # Pure-JAX reference check (same math as the PyTorch forward).
    h_ref = jnp.maximum(z @ w1t + b1, 0.0)
    x_ref = jax.nn.sigmoid(h_ref @ w2t + b2)
    assert out.shape == (batch, output_dim)
    assert jnp.allclose(out, x_ref, atol=1e-5, rtol=1e-5)

    print("KERNEL_OK")
</pallas_src>

<mosaic_0001>
module attributes {stable_mosaic.version = 11 : i64} {
  func.func @decoder_kernel(%arg0: i32, %arg1: memref<56x20xf32, #tpu.memory_space<vmem>>, %arg2: memref<20x512xf32, #tpu.memory_space<vmem>>, %arg3: memref<1x512xf32, #tpu.memory_space<vmem>>, %arg4: memref<512x784xf32, #tpu.memory_space<vmem>>, %arg5: memref<1x784xf32, #tpu.memory_space<vmem>>, %arg6: memref<56x784xf32, #tpu.memory_space<vmem>>) attributes {dimension_semantics = [#tpu.dimension_semantics<parallel>], iteration_bounds = array<i64: 2>, scalar_prefetch = 0 : i64, scratch_operands = 0 : i64, tpu.core_type = #tpu.core_type<tc>, window_params = [{transform_indices = @transform_0, window_bounds = array<i64: 56, 20>}, {pipeline_mode = #tpu.pipeline_mode<synchronous>, transform_indices = @transform_1, window_bounds = array<i64: 20, 512>}, {pipeline_mode = #tpu.pipeline_mode<synchronous>, transform_indices = @transform_2, window_bounds = array<i64: 1, 512>}, {pipeline_mode = #tpu.pipeline_mode<synchronous>, transform_indices = @transform_3, window_bounds = array<i64: 512, 784>}, {pipeline_mode = #tpu.pipeline_mode<synchronous>, transform_indices = @transform_4, window_bounds = array<i64: 1, 784>}, {transform_indices = @transform_5, window_bounds = array<i64: 56, 784>}]} {
    %c0 = arith.constant 0 : index
    %c0_0 = arith.constant 0 : index
    %0 = vector.load %arg1[%c0, %c0_0] : memref<56x20xf32, #tpu.memory_space<vmem>>, vector<56x20xf32>
    %c0_1 = arith.constant 0 : index
    %c0_2 = arith.constant 0 : index
    %1 = vector.load %arg2[%c0_1, %c0_2] : memref<20x512xf32, #tpu.memory_space<vmem>>, vector<20x512xf32>
    %cst = arith.constant dense<0.000000e+00> : vector<56x512xf32>
    %2 = tpu.matmul %0, %1, %cst {dimension_numbers = #tpu.dot_dimension_numbers<[1], [0], [0], [1], [0, 0, 1, 1], [], []>} : vector<56x20xf32>, vector<20x512xf32>, vector<56x512xf32> -> vector<56x512xf32>
    %c0_3 = arith.constant 0 : index
    %c0_4 = arith.constant 0 : index
    %3 = vector.load %arg3[%c0_3, %c0_4] : memref<1x512xf32, #tpu.memory_space<vmem>>, vector<1x512xf32>
    %4 = vector.broadcast %3 : vector<1x512xf32> to vector<56x512xf32>
    %5 = arith.addf %2, %4 : vector<56x512xf32>
    %cst_5 = arith.constant 0.000000e+00 : f32
    %6 = vector.broadcast %cst_5 : f32 to vector<56x512xf32>
    %7 = arith.maximumf %5, %6 : vector<56x512xf32>
    %c0_6 = arith.constant 0 : index
    %c0_7 = arith.constant 0 : index
    %8 = vector.load %arg4[%c0_6, %c0_7] : memref<512x784xf32, #tpu.memory_space<vmem>>, vector<512x784xf32>
    %cst_8 = arith.constant dense<0.000000e+00> : vector<56x784xf32>
    %9 = tpu.matmul %7, %8, %cst_8 {dimension_numbers = #tpu.dot_dimension_numbers<[1], [0], [0], [1], [0, 0, 1, 1], [], []>} : vector<56x512xf32>, vector<512x784xf32>, vector<56x784xf32> -> vector<56x784xf32>
    %c0_9 = arith.constant 0 : index
    %c0_10 = arith.constant 0 : index
    %10 = vector.load %arg5[%c0_9, %c0_10] : memref<1x784xf32, #tpu.memory_space<vmem>>, vector<1x784xf32>
    %11 = vector.broadcast %10 : vector<1x784xf32> to vector<56x784xf32>
    %12 = arith.addf %9, %11 : vector<56x784xf32>
    %13 = arith.negf %12 : vector<56x784xf32>
    %14 = math.exp %13 : vector<56x784xf32>
    %cst_11 = arith.constant 1.000000e+00 : f32
    %15 = vector.broadcast %cst_11 : f32 to vector<56x784xf32>
    %16 = arith.addf %15, %14 : vector<56x784xf32>
    %17 = arith.divf %15, %16 : vector<56x784xf32>
    %c0_12 = arith.constant 0 : index
    %c0_13 = arith.constant 0 : index
    %18 = vector.load %arg6[%c0_12, %c0_13] : memref<56x784xf32, #tpu.memory_space<vmem>>, vector<56x784xf32>
    tpu.vector_store %arg6[%c0_12, %c0_13], %17 {strides = array<i32>} : memref<56x784xf32, #tpu.memory_space<vmem>>, vector<56x784xf32>,
    return
  }
  func.func @transform_0(%arg0: i32) -> (i32, i32) {
    %c0_i32 = arith.constant 0 : i32
    %c0_i32_0 = arith.constant 0 : i32
    return %arg0, %c0_i32 : i32, i32
  }
  func.func @transform_1(%arg0: i32) -> (i32, i32) {
    %c0_i32 = arith.constant 0 : i32
    %c0_i32_0 = arith.constant 0 : i32
    %c0_i32_1 = arith.constant 0 : i32
    return %c0_i32, %c0_i32_0 : i32, i32
  }
  func.func @transform_2(%arg0: i32) -> (i32, i32) {
    %c0_i32 = arith.constant 0 : i32
    %c0_i32_0 = arith.constant 0 : i32
    %c0_i32_1 = arith.constant 0 : i32
    return %c0_i32, %c0_i32_0 : i32, i32
  }
  func.func @transform_3(%arg0: i32) -> (i32, i32) {
    %c0_i32 = arith.constant 0 : i32
    %c0_i32_0 = arith.constant 0 : i32
    %c0_i32_1 = arith.constant 0 : i32
    return %c0_i32, %c0_i32_0 : i32, i32
  }
  func.func @transform_4(%arg0: i32) -> (i32, i32) {
    %c0_i32 = arith.constant 0 : i32
    %c0_i32_0 = arith.constant 0 : i32
    %c0_i32_1 = arith.constant 0 : i32
    return %c0_i32, %c0_i32_0 : i32, i32
  }
  func.func @transform_5(%arg0: i32) -> (i32, i32) {
    %c0_i32 = arith.constant 0 : i32
    %c0_i32_0 = arith.constant 0 : i32
    return %arg0, %c0_i32 : i32, i32
  }
}

</mosaic_0001>

<llo_original>
// kernel: decoder_forward.1
$region0: #{decoder_forward.1}
  #allocation0 [shape = 'u32[]', space=smem, size = 0x4, offset = 0x4, fixed_abs, tag = 'smem constant byte address 0x4 - core index']
  #allocation1 [shape = 'u32[72,128]{1,0:T(1,128)}', space=vmem, size = 0x9000, scoped, tag = 'internal scratch']
  %s0 = inlined_call_operand.vmem [shape: f32[112,20], index: 0, kind: input, shape index: {}]
  %s1 = inlined_call_operand.vmem [shape: f32[20,512], index: 1, kind: input, shape index: {}]
  %s2 = inlined_call_operand.vmem [shape: f32[1,512], index: 2, kind: input, shape index: {}]
  %s3 = inlined_call_operand.vmem [shape: f32[512,784], index: 3, kind: input, shape index: {}]
  %s4 = inlined_call_operand.vmem [shape: f32[1,784], index: 4, kind: input, shape index: {}]
  %s5 = inlined_call_operand.vmem [shape: f32[112,784], index: 5, kind: output, shape index: {}]
  %s6 = sld [smem:[#allocation0]]
  $region53: #{decoder_forward.1} parent=0
    _
  %s8 = ssub.s32 1, %s6
  %s9 = scalar_select 0, %s8, %s6
  loop: start=0, step=1, limit=4
  $region2: #{decoder_forward.1} parent=0 // loop_pre_header
    _
  $region3: #{decoder_forward.1} parent=0 // loop_header
    %s11 = sphi 0, %s15
    %p12 = scmp.ge.s32.totalorder %s11, 4
    %s21 = sphi 0, %s23
    %s24 = sphi 0, %s21
    %s25 = sphi 0, %s24
    %s41 = sphi 0, %s25
    %s45 = sphi 0, %s45
    %s47 = sphi 0, %s45
    %s48 = sphi 0, %s47
    %s62 = sphi 0, %s48
    %s66 = sphi 0, %s66
    %s68 = sphi 0, %s66
    %s69 = sphi 0, %s68
    %s83 = sphi 0, %s69
    %s87 = sphi 0, %s87
    %s89 = sphi 0, %s87
    %s90 = sphi 0, %s89
    %s104 = sphi 0, %s90
    %s108 = sphi 0, %s108
    %s110 = sphi 0, %s108
    %s111 = sphi 0, %s110
    %s125 = sphi 0, %s111
    %s131 = sphi 0, %s133
    %s134 = sphi 0, %s131
    %s135 = sphi 0, %s134
    %s151 = sphi 0, %s135
  $region4: #{decoder_forward.1} parent=0 // loop_header_branch
    %14 = sbr.rel (%p12) target = $region8
  $region5: #{decoder_forward.1} parent=0 // loop_body
    %s16 = ssub.s32 %s11, 1
    %s17 = ssub.s32 %s11, 2
    %s18 = sadd.s32 %s11, 1
    %s19 = ssub.s32 %s11, %s18
    %p20 = scmp.eq.s32.totalorder %s19, 0
    %s22 = sadd.s32 %s21, 1
    %s23 = scalar_select %p20, %s21, %s22
    %p26 = pneg %p20
    %p27 = scmp.eq.s32.totalorder %s11, 1
    %p28 = por %p26, %p27
    %p29 = scmp.ne.s32.totalorder %s21, %s24
    %p30 = scmp.eq.s32.totalorder %s11, 0
    %p31 = por %p29, %p30
    %p32 = scmp.ne.s32.totalorder %s21, %s24
    %p33 = scmp.eq.s32.totalorder %s16, 1
    %p34 = por %p32, %p33
    %p35 = scmp.ne.s32.totalorder %s24, %s25
    %p36 = scmp.eq.s32.totalorder %s16, 0
    %p37 = por %p35, %p36
    %p38 = scmp.ne.s32.totalorder %s24, %s25
    %p39 = scmp.eq.s32.totalorder %s17, 1
    %p40 = por %p38, %p39
    %p42 = scmp.ne.s32.totalorder %s25, %s41
    %p43 = scmp.eq.s32.totalorder %s17, 0
    %p44 = por %p42, %p43
    %s46 = sadd.s32 %s45, 1
    %p49 = scmp.eq.s32.totalorder %s11, 1
    %p50 = scmp.ne.s32.totalorder %s45, %s47
    %p51 = scmp.eq.s32.totalorder %s11, 0
    %p52 = por %p50, %p51
    %p53 = scmp.ne.s32.totalorder %s45, %s47
    %p54 = scmp.eq.s32.totalorder %s16, 1
    %p55 = por %p53, %p54
    %p56 = scmp.ne.s32.totalorder %s47, %s48
    %p57 = scmp.eq.s32.totalorder %s16, 0
    %p58 = por %p56, %p57
    %p59 = scmp.ne.s32.totalorder %s47, %s48
    %p60 = scmp.eq.s32.totalorder %s17, 1
    %p61 = por %p59, %p60
    %p63 = scmp.ne.s32.totalorder %s48, %s62
    %p64 = scmp.eq.s32.totalorder %s17, 0
    %p65 = por %p63, %p64
    %s67 = sadd.s32 %s66, 1
    %p70 = scmp.eq.s32.totalorder %s11, 1
    %p71 = scmp.ne.s32.totalorder %s66, %s68
    %p72 = scmp.eq.s32.totalorder %s11, 0
    %p73 = por %p71, %p72
    %p74 = scmp.ne.s32.totalorder %s66, %s68
    %p75 = scmp.eq.s32.totalorder %s16, 1
    %p76 = por %p74, %p75
    %p77 = scmp.ne.s32.totalorder %s68, %s69
    %p78 = scmp.eq.s32.totalorder %s16, 0
    %p79 = por %p77, %p78
    %p80 = scmp.ne.s32.totalorder %s68, %s69
    %p81 = scmp.eq.s32.totalorder %s17, 1
    %p82 = por %p80, %p81
    %p84 = scmp.ne.s32.totalorder %s69, %s83
    %p85 = scmp.eq.s32.totalorder %s17, 0
    %p86 = por %p84, %p85
    %s88 = sadd.s32 %s87, 1
    %p91 = scmp.eq.s32.totalorder %s11, 1
    %p92 = scmp.ne.s32.totalorder %s87, %s89
    %p93 = scmp.eq.s32.totalorder %s11, 0
    %p94 = por %p92, %p93
    %p95 = scmp.ne.s32.totalorder %s87, %s89
    %p96 = scmp.eq.s32.totalorder %s16, 1
    %p97 = por %p95, %p96
    %p98 = scmp.ne.s32.totalorder %s89, %s90
    %p99 = scmp.eq.s32.totalorder %s16, 0
    %p100 = por %p98, %p99
    %p101 = scmp.ne.s32.totalorder %s89, %s90
    %p102 = scmp.eq.s32.totalorder %s17, 1
    %p103 = por %p101, %p102
    %p105 = scmp.ne.s32.totalorder %s90, %s104
    %p106 = scmp.eq.s32.totalorder %s17, 0
    %p107 = por %p105, %p106
    %s109 = sadd.s32 %s108, 1
    %p112 = scmp.eq.s32.totalorder %s11, 1
    %p113 = scmp.ne.s32.totalorder %s108, %s110
    %p114 = scmp.eq.s32.totalorder %s11, 0
    %p115 = por %p113, %p114
    %p116 = scmp.ne.s32.totalorder %s108, %s110
    %p117 = scmp.eq.s32.totalorder %s16, 1
    %p118 = por %p116, %p117
    %p119 = scmp.ne.s32.totalorder %s110, %s111
    %p120 = scmp.eq.s32.totalorder %s16, 0
    %p121 = por %p119, %p120
    %p122 = scmp.ne.s32.totalorder %s110, %s111
    %p123 = scmp.eq.s32.totalorder %s17, 1
    %p124 = por %p122, %p123
    %p126 = scmp.ne.s32.totalorder %s111, %s125
    %p127 = scmp.eq.s32.totalorder %s17, 0
    %p128 = por %p126, %p127
    %s129 = ssub.s32 %s11, %s18
    %p130 = scmp.eq.s32.totalorder %s129, 0
    %s132 = sadd.s32 %s131, 1
    %s133 = scalar_select %p130, %s131, %s132
    %p136 = pneg %p130
    %p137 = scmp.eq.s32.totalorder %s11, 1
    %p138 = por %p136, %p137
    %p139 = scmp.ne.s32.totalorder %s131, %s134
    %p140 = scmp.eq.s32.totalorder %s11, 0
    %p141 = por %p139, %p140
    %p142 = scmp.ne.s32.totalorder %s131, %s134
    %p143 = scmp.eq.s32.totalorder %s16, 1
    %p144 = por %p142, %p143
    %p145 = scmp.ne.s32.totalorder %s134, %s135
    %p146 = scmp.eq.s32.totalorder %s16, 0
    %p147 = por %p145, %p146
    %p148 = scmp.ne.s32.totalorder %s134, %s135
    %p149 = scmp.eq.s32.totalorder %s17, 1
    %p150 = por %p148, %p149
    %p152 = scmp.ne.s32.totalorder %s135, %s151
    %p153 = scmp.eq.s32.totalorder %s17, 0
    %p154 = por %p152, %p153
    %p155 = scmp.le.s32.totalorder 1, %s11
    %p156 = scmp.lt.s32.totalorder %s11, 3
    %p157 = pnand %p155, %p156
    %p158 = pneg %p157
    // Predicated region
    $region9: #{decoder_forward.1} parent=5 // pred_check
      _
    $region10: #{decoder_forward.1} parent=5 // pred_check_branch
      %160 = sbr.rel (%p157) target = $region12
    $region11: #{decoder_forward.1} parent=5 // pred_region
      %s161 = ssub.s32 %s11, 1
      // Predicated region
      $region13: #{decoder_forward.1} parent=11 // pred_check
        %p162 = pneg %p58
      $region14: #{decoder_forward.1} parent=11 // pred_check_branch
        %164 = sbr.rel (%p162) target = $region16
      $region15: #{decoder_forward.1} parent=11 // pred_region
        _
      $region16: #{decoder_forward.1} parent=11 // pred_fallthru
        _
      // Predicated region
      $region17: #{decoder_forward.1} parent=11 // pred_check
        %p165 = pneg %p79
      $region18: #{decoder_forward.1} parent=11 // pred_check_branch
        %167 = sbr.rel (%p165) target = $region20
      $region19: #{decoder_forward.1} parent=11 // pred_region
        _
      $region20: #{decoder_forward.1} parent=11 // pred_fallthru
        _
      // Predicated region
      $region21: #{decoder_forward.1} parent=11 // pred_check
        %p168 = pneg %p100
      $region22: #{decoder_forward.1} parent=11 // pred_check_branch
        %170 = sbr.rel (%p168) target = $region24
      $region23: #{decoder_forward.1} parent=11 // pred_region
        _
      $region24: #{decoder_forward.1} parent=11 // pred_fallthru
        _
      // Predicated region
      $region25: #{decoder_forward.1} parent=11 // pred_check
        %p171 = pneg %p121
      $region26: #{decoder_forward.1} parent=11 // pred_check_branch
        %173 = sbr.rel (%p171) target = $region28
      $region27: #{decoder_forward.1} parent=11 // pred_region
        _
      $region28: #{decoder_forward.1} parent=11 // pred_fallthru
        _
    $region12: #{decoder_forward.1} parent=5 // pred_fallthru
      _
    %p174 = scmp.lt.s32.totalorder %s11, 2
    // Predicated region
    $region29: #{decoder_forward.1} parent=5 // pred_check
      %p175 = pneg %p174
    $region30: #{decoder_forward.1} parent=5 // pred_check_branch
      %177 = sbr.rel (%p175) target = $region32
    $region31: #{decoder_forward.1} parent=5 // pred_region
      // Predicated region
      $region33: #{decoder_forward.1} parent=31 // pred_check
        %p178 = pneg %p31
      $region34: #{decoder_forward.1} parent=31 // pred_check_branch
        %180 = sbr.rel (%p178) target = $region36
      $region35: #{decoder_forward.1} parent=31 // pred_region
        %s181 = smul.u32 7, %s11
        %p182 = scmp.lt.s32.totalorder %s181, 13
        %s183 = scalar_select %p182, %s181, 13
        %s184 = smul.addr %s183, 8
        %s185 = scalar_lea.vmem %s0, %s184
        %s186 = smul.u32 7, %s11
      $region36: #{decoder_forward.1} parent=31 // pred_fallthru
        _
    $region32: #{decoder_forward.1} parent=5 // pred_fallthru
      _
    %p187 = scmp.le.s32.totalorder 1, %s11
    %p188 = scmp.lt.s32.totalorder %s11, 3
    %p189 = pnand %p187, %p188
    %p190 = pneg %p189
    // Predicated region
    $region37: #{decoder_forward.1} parent=5 // pred_check
      _
    $region38: #{decoder_forward.1} parent=5 // pred_check_branch
      %192 = sbr.rel (%p189) target = $region40
    $region39: #{decoder_forward.1} parent=5 // pred_region
      %s193 = ssub.s32 %s11, 1
      %s194 = smul.u32 7, %s16
      %p195 = scmp.lt.s32.totalorder %s194, 13
      %s196 = scalar_select %p195, %s194, 13
      %s197 = smul.addr %s196, 8
      %s198 = scalar_lea.vmem %s0, %s197
      %p199 = pneg %p37
      %p200 = pneg %p34
      %p201 = pneg %p58
      %p202 = pneg %p55
      %p203 = pneg %p79
      %p204 = pneg %p76
      %p205 = pneg %p100
      %p206 = pneg %p97
      %p207 = pneg %p121
      %p208 = pneg %p118
      %p209 = pneg %p147
      %p210 = pneg %p144
      %s211 = smul.u32 7, %s16
      %p212 = scmp.lt.s32.totalorder %s211, 13
      %s213 = scalar_select %p212, %s211, 13
      %s214 = smul.addr %s213, 7
      %s215 = smul.addr %s214, 8
      %s216 = scalar_lea.vmem %s5, %s215
      %s217 = smul.u32 7, %s16
      %p218 = scmp.lt.s32.totalorder %s217, 13
      %s219 = scalar_select %p218, %s217, 13
      %s220 = smul.addr %s219, 8
      %s221 = scalar_lea.vmem %s0, %s220
      %s222 = smul.u32 7, %s16
      %s223 = smul.u32 7, %s16
      %p224 = scmp.lt.s32.totalorder %s223, 13
      %s225 = scalar_select %p224, %s223, 13
      %s226 = smul.addr %s225, 7
      %s227 = smul.addr %s226, 8
      %s228 = scalar_lea.vmem %s5, %s227
      %s229 = smul.u32 7, %s16
      %v230 = vld [vmem:[%s221] sm:$0xff]
      %v231 = vld [vmem:[%s221 + $0x8] sm:$0xff]
      %v232 = vld [vmem:[%s221 + $0x10] sm:$0xff]
      %v233 = vld [vmem:[%s221 + $0x18] sm:$0xff]
      %v234 = vld [vmem:[%s221 + $0x20] sm:$0xff]
      %v235 = vld [vmem:[%s221 + $0x28] sm:$0xff]
      %v236 = vld [vmem:[%s221 + $0x30] sm:$0xff]
      %v237 = vld [vmem:[%s1] sm:$0xff]
      %v238 = vld [vmem:[%s1 + $0x8] sm:$0xff]
      %v239 = vld [vmem:[%s1 + $0x10] sm:$0xff]
      %v240 = vld [vmem:[%s1 + $0x18] sm:$0xff]
      %v241 = vld [vmem:[%s1 + $0x20] sm:$0xff]
      %v242 = vld [vmem:[%s1 + $0x28] sm:$0xff]
      %v243 = vld [vmem:[%s1 + $0x30] sm:$0xff]
      %v244 = vld [vmem:[%s1 + $0x38] sm:$0xff]
      %v245 = vld [vmem:[%s1 + $0x40] sm:$0xf]
      %v246 = vld [vmem:[%s1 + $0x48] sm:$0xf]
      %v247 = vld [vmem:[%s1 + $0x50] sm:$0xf]
      %v248 = vld [vmem:[%s1 + $0x58] sm:$0xf]
      %v249 = vld [vmem:[%s2] sm:$0xf]
      %v251 = vperm.slane %v249, 0
      %v252 = vperm.slane %v249, 1
      %v253 = vperm.slane %v249, 2
      %v254 = vperm.slane %v249, 3
      %vm259 = vcmask 162816
      %v261 = vsel %vm259, %v230, 0
      %v264 = vsel %vm259, %v231, 0
      %v267 = vsel %vm259, %v232, 0
      %v270 = vsel %vm259, %v233, 0
      %v273 = vsel %vm259, %v234, 0
      %v276 = vsel %vm259, %v235, 0
      %v279 = vsel %vm259, %v236, 0
      %vm281 = vcmask 1043456
      %v283 = vsel %vm281, %v245, 0
      %v286 = vsel %vm281, %v246, 0
      %v289 = vsel %vm281, %v247, 0
      %v292 = vsel %vm281, %v248, 0
      %294 = vmatpush.msra.mxu0 0.0
      %295 = vmatpush.msra.mxu0 0.0
      %296 = vmatpush.msra.mxu0 0.0
      %297 = vmatpush.msra.mxu0 0.0
      %298 = vmatpush.msra.mxu0 0.0
      %299 = vmatpush.msra.mxu0 0.0
      %300 = vmatpush.msra.mxu0 0.0
      %301 = vmatpush.msra.mxu0 0.0
      %302 = vmatpush.msra.mxu0 0.0
      %303 = vmatpush.msra.mxu0 0.0
      %304 = vmatpush.msra.mxu0 0.0
      %305 = vmatpush.msra.mxu0 0.0
      %306 = vmatpush.msra.mxu0 0.0
      %307 = vmatpush.msra.mxu0 %v283
      %308 = vmatpush.msra.mxu0 %v241
      %309 = vmatpush.msra.mxu0 %v237
      %310 = vmatmul.f32.gmra.mxu0 %v261
      %v311 = vpop.f32.mrf.mxu0
      %v312 = vadd.f32 %v251, %v311
      %313 = vmatmul.f32.gmra.mxu0 %v264
      %v314 = vpop.f32.mrf.mxu0
      %v315 = vadd.f32 %v251, %v314
      %316 = vmatmul.f32.gmra.mxu0 %v267
      %v317 = vpop.f32.mrf.mxu0
      %v318 = vadd.f32 %v251, %v317
      %319 = vmatmul.f32.gmra.mxu0 %v270
      %v320 = vpop.f32.mrf.mxu0
      %v321 = vadd.f32 %v251, %v320
      %322 = vmatmul.f32.gmra.mxu0 %v273
      %v323 = vpop.f32.mrf.mxu0
      %v324 = vadd.f32 %v251, %v323
      %325 = vmatmul.f32.gmra.mxu0 %v276
      %v326 = vpop.f32.mrf.mxu0
      %v327 = vadd.f32 %v251, %v326
      %328 = vmatmul.f32.gmra.mxu0 %v279
      %v329 = vpop.f32.mrf.mxu0
      %v330 = vadd.f32 %v251, %v329
      %331 = vdwg.mxu0
      %332 = vmatpush.msra.mxu0 0.0
      %333 = vmatpush.msra.mxu0 0.0
      %334 = vmatpush.msra.mxu0 0.0
      %335 = vmatpush.msra.mxu0 0.0
      %336 = vmatpush.msra.mxu0 0.0
      %337 = vmatpush.msra.mxu0 0.0
      %338 = vmatpush.msra.mxu0 0.0
      %339 = vmatpush.msra.mxu0 0.0
      %340 = vmatpush.msra.mxu0 0.0
      %341 = vmatpush.msra.mxu0 0.0
      %342 = vmatpush.msra.mxu0 0.0
      %343 = vmatpush.msra.mxu0 0.0
      %344 = vmatpush.msra.mxu0 0.0
      %345 = vmatpush.msra.mxu0 %v286
      %346 = vmatpush.msra.mxu0 %v242
      %347 = vmatpush.msra.mxu0 %v238
      %348 = vmatmul.f32.gmra.mxu0 %v261
      %v349 = vpop.f32.mrf.mxu0
      %v350 = vadd.f32 %v252, %v349
      %351 = vmatmul.f32.gmra.mxu0 %v264
      %v352 = vpop.f32.mrf.mxu0
      %v353 = vadd.f32 %v252, %v352
      %354 = vmatmul.f32.gmra.mxu0 %v267
      %v355 = vpop.f32.mrf.mxu0
      %v356 = vadd.f32 %v252, %v355
      %357 = vmatmul.f32.gmra.mxu0 %v270
      %v358 = vpop.f32.mrf.mxu0
      %v359 = vadd.f32 %v252, %v358
      %360 = vmatmul.f32.gmra.mxu0 %v273
      %v361 = vpop.f32.mrf.mxu0
      %v362 = vadd.f32 %v252, %v361
      %363 = vmatmul.f32.gmra.mxu0 %v276
      %v364 = vpop.f32.mrf.mxu0
      %v365 = vadd.f32 %v252, %v364
      %366 = vmatmul.f32.gmra.mxu0 %v279
      %v367 = vpop.f32.mrf.mxu0
      %v368 = vadd.f32 %v252, %v367
      %369 = vdwg.mxu0
      %370 = vmatpush.msra.mxu0 0.0
      %371 = vmatpush.msra.mxu0 0.0
      %372 = vmatpush.msra.mxu0 0.0
      %373 = vmatpush.msra.mxu0 0.0
      %374 = vmatpush.msra.mxu0 0.0
      %375 = vmatpush.msra.mxu0 0.0
      %376 = vmatpush.msra.mxu0 0.0
      %377 = vmatpush.msra.mxu0 0.0
      %378 = vmatpush.msra.mxu0 0.0
      %379 = vmatpush.msra.mxu0 0.0
      %380 = vmatpush.msra.mxu0 0.0
      %381 = vmatpush.msra.mxu0 0.0
      %382 = vmatpush.msra.mxu0 0.0
      %383 = vmatpush.msra.mxu0 %v289
      %384 = vmatpush.msra.mxu0 %v243
      %385 = vmatpush.msra.mxu0 %v239
      %386 = vmatmul.f32.gmra.mxu0 %v261
      %v387 = vpop.f32.mrf.mxu0
      %v388 = vadd.f32 %v253, %v387
      %389 = vmatmul.f32.gmra.mxu0 %v264
      %v390 = vpop.f32.mrf.mxu0
      %v391 = vadd.f32 %v253, %v390
      %392 = vmatmul.f32.gmra.mxu0 %v267
      %v393 = vpop.f32.mrf.mxu0
      %v394 = vadd.f32 %v253, %v393
      %395 = vmatmul.f32.gmra.mxu0 %v270
      %v396 = vpop.f32.mrf.mxu0
      %v397 = vadd.f32 %v253, %v396
      %398 = vmatmul.f32.gmra.mxu0 %v273
      %v399 = vpop.f32.mrf.mxu0
      %v400 = vadd.f32 %v253, %v399
      %401 = vmatmul.f32.gmra.mxu0 %v276
      %v402 = vpop.f32.mrf.mxu0
      %v403 = vadd.f32 %v253, %v402
      %404 = vmatmul.f32.gmra.mxu0 %v279
      %v405 = vpop.f32.mrf.mxu0
      %v406 = vadd.f32 %v253, %v405
      %407 = vdwg.mxu0
      %408 = vmatpush.msra.mxu0 0.0
      %409 = vmatpush.msra.mxu0 0.0
      %410 = vmatpush.msra.mxu0 0.0
      %411 = vmatpush.msra.mxu0 0.0
      %412 = vmatpush.msra.mxu0 0.0
      %413 = vmatpush.msra.mxu0 0.0
      %414 = vmatpush.msra.mxu0 0.0
      %415 = vmatpush.msra.mxu0 0.0
      %416 = vmatpush.msra.mxu0 0.0
      %417 = vmatpush.msra.mxu0 0.0
      %418 = vmatpush.msra.mxu0 0.0
      %419 = vmatpush.msra.mxu0 0.0
      %420 = vmatpush.msra.mxu0 0.0
      %421 = vmatpush.msra.mxu0 %v292
      %422 = vmatpush.msra.mxu0 %v244
      %423 = vmatpush.msra.mxu0 %v240
      %424 = vmatmul.f32.gmra.mxu0 %v261
      %v425 = vpop.f32.mrf.mxu0
      %v426 = vadd.f32 %v254, %v425
      %427 = vmatmul.f32.gmra.mxu0 %v264
      %v428 = vpop.f32.mrf.mxu0
      %v429 = vadd.f32 %v254, %v428
      %430 = vmatmul.f32.gmra.mxu0 %v267
      %v431 = vpop.f32.mrf.mxu0
      %v432 = vadd.f32 %v254, %v431
      %433 = vmatmul.f32.gmra.mxu0 %v270
      %v434 = vpop.f32.mrf.mxu0
      %v435 = vadd.f32 %v254, %v434
      %436 = vmatmul.f32.gmra.mxu0 %v273
      %v437 = vpop.f32.mrf.mxu0
      %v438 = vadd.f32 %v254, %v437
      %439 = vmatmul.f32.gmra.mxu0 %v276
      %v440 = vpop.f32.mrf.mxu0
      %v441 = vadd.f32 %v254, %v440
      %442 = vmatmul.f32.gmra.mxu0 %v279
      %v443 = vpop.f32.mrf.mxu0
      %v444 = vadd.f32 %v254, %v443
      %445 = vdwg.mxu0
      %v446 = vmax.f32 %v312, 0.0
      %v447 = vmax.f32 %v350, 0.0
      %v448 = vmax.f32 %v388, 0.0
      %v449 = vmax.f32 %v426, 0.0
      %v450 = vmax.f32 %v315, 0.0
      %v451 = vmax.f32 %v353, 0.0
      %v452 = vmax.f32 %v391, 0.0
      %v453 = vmax.f32 %v429, 0.0
      %v454 = vmax.f32 %v318, 0.0
      %v455 = vmax.f32 %v356, 0.0
      %v456 = vmax.f32 %v394, 0.0
      %v457 = vmax.f32 %v432, 0.0
      %v458 = vmax.f32 %v321, 0.0
      %v459 = vmax.f32 %v359, 0.0
      %v460 = vmax.f32 %v397, 0.0
      %v461 = vmax.f32 %v435, 0.0
      %v462 = vmax.f32 %v324, 0.0
      %v463 = vmax.f32 %v362, 0.0
      %v464 = vmax.f32 %v400, 0.0
      %v465 = vmax.f32 %v438, 0.0
      %v466 = vmax.f32 %v327, 0.0
      %v467 = vmax.f32 %v365, 0.0
      %v468 = vmax.f32 %v403, 0.0
      %v469 = vmax.f32 %v441, 0.0
      %v470 = vmax.f32 %v330, 0.0
      %v471 = vmax.f32 %v368, 0.0
      %v472 = vmax.f32 %v406, 0.0
      %v473 = vmax.f32 %v444, 0.0
      %v474 = vld [vmem:[%s3] sm:$0xff]
      %v475 = vld [vmem:[%s3 + $0x8] sm:$0xff]
      %v476 = vld [vmem:[%s3 + $0x10] sm:$0xff]
      %v477 = vld [vmem:[%s3 + $0x18] sm:$0xff]
      %v478 = vld [vmem:[%s3 + $0x20] sm:$0xff]
      %v479 = vld [vmem:[%s3 + $0x28] sm:$0xff]
      %v480 = vld [vmem:[%s3 + $0x30] sm:$0xff]
      %v481 = vld [vmem:[%s3 + $0x38] sm:$0xff]
      %v482 = vld [vmem:[%s3 + $0x40] sm:$0xff]
      %v483 = vld [vmem:[%s3 + $0x48] sm:$0xff]
      %v484 = vld [vmem:[%s3 + $0x50] sm:$0xff]
      %v485 = vld [vmem:[%s3 + $0x58] sm:$0xff]
      %v486 = vld [vmem:[%s3 + $0x60] sm:$0xff]
      %v487 = vld [vmem:[%s3 + $0x68] sm:$0xff]
      %v488 = vld [vmem:[%s3 + $0x70] sm:$0xff]
      %v489 = vld [vmem:[%s3 + $0x78] sm:$0xff]
      %v490 = vld [vmem:[%s3 + $0x80] sm:$0xff]
      %v491 = vld [vmem:[%s3 + $0x88] sm:$0xff]
      %v492 = vld [vmem:[%s3 + $0x90] sm:$0xff]
      %v493 = vld [vmem:[%s3 + $0x98] sm:$0xff]
      %v494 = vld [vmem:[%s3 + $0xa0] sm:$0xff]
      %v495 = vld [vmem:[%s3 + $0xa8] sm:$0xff]
      %v496 = vld [vmem:[%s3 + $0xb0] sm:$0xff]
      %v497 = vld [vmem:[%s3 + $0xb8] sm:$0xff]
      %v498 = vld [vmem:[%s3 + $0xc0] sm:$0xff]
      %v499 = vld [vmem:[%s3 + $0xc8] sm:$0xff]
      %v500 = vld [vmem:[%s3 + $0xd0] sm:$0xff]
      %v501 = vld [vmem:[%s3 + $0xd8] sm:$0xff]
      %v502 = vld [vmem:[%s3 + $0xe0] sm:$0xff]
      %v503 = vld [vmem:[%s3 + $0xe8] sm:$0xff]
      %v504 = vld [vmem:[%s3 + $0xf0] sm:$0xff]
      %v505 = vld [vmem:[%s3 + $0xf8] sm:$0xff]
      %v506 = vld [vmem:[%s3 + $0x100] sm:$0xff]
      %v507 = vld [vmem:[%s3 + $0x108] sm:$0xff]
      %v508 = vld [vmem:[%s3 + $0x110] sm:$0xff]
      %v509 = vld [vmem:[%s3 + $0x118] sm:$0xff]
      %v510 = vld [vmem:[%s3 + $0x120] sm:$0xff]
      %v511 = vld [vmem:[%s3 + $0x128] sm:$0xff]
      %v512 = vld [vmem:[%s3 + $0x130] sm:$0xff]
      %v513 = vld [vmem:[%s3 + $0x138] sm:$0xff]
      %v514 = vld [vmem:[%s3 + $0x140] sm:$0xff]
      %v515 = vld [vmem:[%s3 + $0x148] sm:$0xff]
      %v516 = vld [vmem:[%s3 + $0x150] sm:$0xff]
      %v517 = vld [vmem:[%s3 + $0x158] sm:$0xff]
      %v518 = vld [vmem:[%s3 + $0x160] sm:$0xff]
      %v519 = vld [vmem:[%s3 + $0x168] sm:$0xff]
      %v520 = vld [vmem:[%s3 + $0x170] sm:$0xff]
      %v521 = vld [vmem:[%s3 + $0x178] sm:$0xff]
      %v522 = vld [vmem:[%s3 + $0x180] sm:$0xff]
      %v523 = vld [vmem:[%s3 + $0x188] sm:$0xff]
      %v524 = vld [vmem:[%s3 + $0x190] sm:$0xff]
      %v525 = vld [vmem:[%s3 + $0x198] sm:$0xff]
      %v526 = vld [vmem:[%s3 + $0x1a0] sm:$0xff]
      %v527 = vld [vmem:[%s3 + $0x1a8] sm:$0xff]
      %v528 = vld [vmem:[%s3 + $0x1b0] sm:$0xff]
      %v529 = vld [vmem:[%s3 + $0x1b8] sm:$0xff]
      %v530 = vld [vmem:[%s3 + $0x1c0] sm:$0xff]
      %v531 = vld [vmem:[%s3 + $0x1c8] sm:$0xff]
      %v532 = vld [vmem:[%s3 + $0x1d0] sm:$0xff]
      %v533 = vld [vmem:[%s3 + $0x1d8] sm:$0xff]
      %v534 = vld [vmem:[%s3 + $0x1e0] sm:$0xff]
      %v535 = vld [vmem:[%s3 + $0x1e8] sm:$0xff]
      %v536 = vld [vmem:[%s3 + $0x1f0] sm:$0xff]
      %v537 = vld [vmem:[%s3 + $0x1f8] sm:$0xff]
      %v538 = vld [vmem:[%s3 + $0x200] sm:$0xff]
      %v539 = vld [vmem:[%s3 + $0x208] sm:$0xff]
      %v540 = vld [vmem:[%s3 + $0x210] sm:$0xff]
      %v541 = vld [vmem:[%s3 + $0x218] sm:$0xff]
      %v542 = vld [vmem:[%s3 + $0x220] sm:$0xff]
      %v543 = vld [vmem:[%s3 + $0x228] sm:$0xff]
      %v544 = vld [vmem:[%s3 + $0x230] sm:$0xff]
      %v545 = vld [vmem:[%s3 + $0x238] sm:$0xff]
      %v546 = vld [vmem:[%s3 + $0x240] sm:$0xff]
      %v547 = vld [vmem:[%s3 + $0x248] sm:$0xff]
      %v548 = vld [vmem:[%s3 + $0x250] sm:$0xff]
      %v549 = vld [vmem:[%s3 + $0x258] sm:$0xff]
      %v550 = vld [vmem:[%s3 + $0x260] sm:$0xff]
      %v551 = vld [vmem:[%s3 + $0x268] sm:$0xff]
      %v552 = vld [vmem:[%s3 + $0x270] sm:$0xff]
      %v553 = vld [vmem:[%s3 + $0x278] sm:$0xff]
      %v554 = vld [vmem:[%s3 + $0x280] sm:$0xff]
      %v555 = vld [vmem:[%s3 + $0x288] sm:$0xff]
      %v556 = vld [vmem:[%s3 + $0x290] sm:$0xff]
      %v557 = vld [vmem:[%s3 + $0x298] sm:$0xff]
      %v558 = vld [vmem:[%s3 + $0x2a0] sm:$0xff]
      %v559 = vld [vmem:[%s3 + $0x2a8] sm:$0xff]
      %v560 = vld [vmem:[%s3 + $0x2b0] sm:$0xff]
      %v561 = vld [vmem:[%s3 + $0x2b8] sm:$0xff]
      %v562 = vld [vmem:[%s3 + $0x2c0] sm:$0xff]
      %v563 = vld [vmem:[%s3 + $0x2c8] sm:$0xff]
      %v564 = vld [vmem:[%s3 + $0x2d0] sm:$0xff]
      %v565 = vld [vmem:[%s3 + $0x2d8] sm:$0xff]
      %v566 = vld [vmem:[%s3 + $0x2e0] sm:$0xff]
      %v567 = vld [vmem:[%s3 + $0x2e8] sm:$0xff]
      %v568 = vld [vmem:[%s3 + $0x2f0] sm:$0xff]
      %v569 = vld [vmem:[%s3 + $0x2f8] sm:$0xff]
      %v570 = vld [vmem:[%s3 + $0x300] sm:$0xff]
      %v571 = vld [vmem:[%s3 + $0x308] sm:$0xff]
      %v572 = vld [vmem:[%s3 + $0x310] sm:$0xff]
      %v573 = vld [vmem:[%s3 + $0x318] sm:$0xff]
      %v574 = vld [vmem:[%s3 + $0x320] sm:$0xff]
      %v575 = vld [vmem:[%s3 + $0x328] sm:$0xff]
      %v576 = vld [vmem:[%s3 + $0x330] sm:$0xff]
      %v577 = vld [vmem:[%s3 + $0x338] sm:$0xff]
      %v578 = vld [vmem:[%s3 + $0x340] sm:$0xff]
      %v579 = vld [vmem:[%s3 + $0x348] sm:$0xff]
      %v580 = vld [vmem:[%s3 + $0x350] sm:$0xff]
      %v581 = vld [vmem:[%s3 + $0x358] sm:$0xff]
      %v582 = vld [vmem:[%s3 + $0x360] sm:$0xff]
      %v583 = vld [vmem:[%s3 + $0x368] sm:$0xff]
      %v584 = vld [vmem:[%s3 + $0x370] sm:$0xff]
      %v585 = vld [vmem:[%s3 + $0x378] sm:$0xff]
      %v586 = vld [vmem:[%s3 + $0x380] sm:$0xff]
      %v587 = vld [vmem:[%s3 + $0x388] sm:$0xff]
      %v588 = vld [vmem:[%s3 + $0x390] sm:$0xff]
      %v589 = vld [vmem:[%s3 + $0x398] sm:$0xff]
      %v590 = vld [vmem:[%s3 + $0x3a0] sm:$0xff]
      %v591 = vld [vmem:[%s3 + $0x3a8] sm:$0xff]
      %v592 = vld [vmem:[%s3 + $0x3b0] sm:$0xff]
      %v593 = vld [vmem:[%s3 + $0x3b8] sm:$0xff]
      %v594 = vld [vmem:[%s3 + $0x3c0] sm:$0xff]
      %v595 = vld [vmem:[%s3 + $0x3c8] sm:$0xff]
      %v596 = vld [vmem:[%s3 + $0x3d0] sm:$0xff]
      %v597 = vld [vmem:[%s3 + $0x3d8] sm:$0xff]
      %v598 = vld [vmem:[%s3 + $0x3e0] sm:$0xff]
      %v599 = vld [vmem:[%s3 + $0x3e8] sm:$0xff]
      %v600 = vld [vmem:[%s3 + $0x3f0] sm:$0xff]
      %v601 = vld [vmem:[%s3 + $0x3f8] sm:$0xff]
      %v602 = vld [vmem:[%s3 + $0x400] sm:$0xff]
      %v603 = vld [vmem:[%s3 + $0x408] sm:$0xff]
      %v604 = vld [vmem:[%s3 + $0x410] sm:$0xff]
      %v605 = vld [vmem:[%s3 + $0x418] sm:$0xff]
      %v606 = vld [vmem:[%s3 + $0x420] sm:$0xff]
      %v607 = vld [vmem:[%s3 + $0x428] sm:$0xff]
      %v608 = vld [vmem:[%s3 + $0x430] sm:$0xff]
      %v609 = vld [vmem:[%s3 + $0x438] sm:$0xff]
      %v610 = vld [vmem:[%s3 + $0x440] sm:$0xff]
      %v611 = vld [vmem:[%s3 + $0x448] sm:$0xff]
      %v612 = vld [vmem:[%s3 + $0x450] sm:$0xff]
      %v613 = vld [vmem:[%s3 + $0x458] sm:$0xff]
      %v614 = vld [vmem:[%s3 + $0x460] sm:$0xff]
      %v615 = vld [vmem:[%s3 + $0x468] sm:$0xff]
      %v616 = vld [vmem:[%s3 + $0x470] sm:$0xff]
      %v617 = vld [vmem:[%s3 + $0x478] sm:$0xff]
      %v618 = vld [vmem:[%s3 + $0x480] sm:$0xff]
      %v619 = vld [vmem:[%s3 + $0x488] sm:$0xff]
      %v620 = vld [vmem:[%s3 + $0x490] sm:$0xff]
      %v621 = vld [vmem:[%s3 + $0x498] sm:$0xff]
      %v622 = vld [vmem:[%s3 + $0x4a0] sm:$0xff]
      %v623 = vld [vmem:[%s3 + $0x4a8] sm:$0xff]
      %v624 = vld [vmem:[%s3 + $0x4b0] sm:$0xff]
      %v625 = vld [vmem:[%s3 + $0x4b8] sm:$0xff]
      %v626 = vld [vmem:[%s3 + $0x4c0] sm:$0xff]
      %v627 = vld [vmem:[%s3 + $0x4c8] sm:$0xff]
      %v628 = vld [vmem:[%s3 + $0x4d0] sm:$0xff]
      %v629 = vld [vmem:[%s3 + $0x4d8] sm:$0xff]
      %v630 = vld [vmem:[%s3 + $0x4e0] sm:$0xff]
      %v631 = vld [vmem:[%s3 + $0x4e8] sm:$0xff]
      %v632 = vld [vmem:[%s3 + $0x4f0] sm:$0xff]
      %v633 = vld [vmem:[%s3 + $0x4f8] sm:$0xff]
      %v634 = vld [vmem:[%s3 + $0x500] sm:$0xff]
      %v635 = vld [vmem:[%s3 + $0x508] sm:$0xff]
      %v636 = vld [vmem:[%s3 + $0x510] sm:$0xff]
      %v637 = vld [vmem:[%s3 + $0x518] sm:$0xff]
      %v638 = vld [vmem:[%s3 + $0x520] sm:$0xff]
      %v639 = vld [vmem:[%s3 + $0x528] sm:$0xff]
      %v640 = vld [vmem:[%s3 + $0x530] sm:$0xff]
      %v641 = vld [vmem:[%s3 + $0x538] sm:$0xff]
      %v642 = vld [vmem:[%s3 + $0x540] sm:$0xff]
      %v643 = vld [vmem:[%s3 + $0x548] sm:$0xff]
      %v644 = vld [vmem:[%s3 + $0x550] sm:$0xff]
      %v645 = vld [vmem:[%s3 + $0x558] sm:$0xff]
      %v646 = vld [vmem:[%s3 + $0x560] sm:$0xff]
      %v647 = vld [vmem:[%s3 + $0x568] sm:$0xff]
      %v648 = vld [vmem:[%s3 + $0x570] sm:$0xff]
      %v649 = vld [vmem:[%s3 + $0x578] sm:$0xff]
      %v650 = vld [vmem:[%s3 + $0x580] sm:$0xff]
      %v651 = vld [vmem:[%s3 + $0x588] sm:$0xff]
      %v652 = vld [vmem:[%s3 + $0x590] sm:$0xff]
      %v653 = vld [vmem:[%s3 + $0x598] sm:$0xff]
      %v654 = vld [vmem:[%s3 + $0x5a0] sm:$0xff]
      %v655 = vld [vmem:[%s3 + $0x5a8] sm:$0xff]
      %v656 = vld [vmem:[%s3 + $0x5b0] sm:$0xff]
      %v657 = vld [vmem:[%s3 + $0x5b8] sm:$0xff]
      %v658 = vld [vmem:[%s3 + $0x5c0] sm:$0xff]
      %v659 = vld [vmem:[%s3 + $0x5c8] sm:$0xff]
      %v660 = vld [vmem:[%s3 + $0x5d0] sm:$0xff]
      %v661 = vld [vmem:[%s3 + $0x5d8] sm:$0xff]
      %v662 = vld [vmem:[%s3 + $0x5e0] sm:$0xff]
      %v663 = vld [vmem:[%s3 + $0x5e8] sm:$0xff]
      %v664 = vld [vmem:[%s3 + $0x5f0] sm:$0xff]
      %v665 = vld [vmem:[%s3 + $0x5f8] sm:$0xff]
      %v666 = vld [vmem:[%s3 + $0x600] sm:$0xff]
      %v667 = vld [vmem:[%s3 + $0x608] sm:$0xff]
      %v668 = vld [vmem:[%s3 + $0x610] sm:$0xff]
      %v669 = vld [vmem:[%s3 + $0x618] sm:$0xff]
      %v670 = vld [vmem:[%s3 + $0x620] sm:$0xff]
      %v671 = vld [vmem:[%s3 + $0x628] sm:$0xff]
      %v672 = vld [vmem:[%s3 + $0x630] sm:$0xff]
      %v673 = vld [vmem:[%s3 + $0x638] sm:$0xff]
      %v674 = vld [vmem:[%s3 + $0x640] sm:$0xff]
      %v675 = vld [vmem:[%s3 + $0x648] sm:$0xff]
      %v676 = vld [vmem:[%s3 + $0x650] sm:$0xff]
      %v677 = vld [vmem:[%s3 + $0x658] sm:$0xff]
      %v678 = vld [vmem:[%s3 + $0x660] sm:$0xff]
      %v679 = vld [vmem:[%s3 + $0x668] sm:$0xff]
      %v680 = vld [vmem:[%s3 + $0x670] sm:$0xff]
      %v681 = vld [vmem:[%s3 + $0x678] sm:$0xff]
      %v682 = vld [vmem:[%s3 + $0x680] sm:$0xff]
      %v683 = vld [vmem:[%s3 + $0x688] sm:$0xff]
      %v684 = vld [vmem:[%s3 + $0x690] sm:$0xff]
      %v685 = vld [vmem:[%s3 + $0x698] sm:$0xff]
      %v686 = vld [vmem:[%s3 + $0x6a0] sm:$0xff]
      %v687 = vld [vmem:[%s3 + $0x6a8] sm:$0xff]
      %v688 = vld [vmem:[%s3 + $0x6b0] sm:$0xff]
      %v689 = vld [vmem:[%s3 + $0x6b8] sm:$0xff]
      %v690 = vld [vmem:[%s3 + $0x6c0] sm:$0xff]
      %v691 = vld [vmem:[%s3 + $0x6c8] sm:$0xff]
      %v692 = vld [vmem:[%s3 + $0x6d0] sm:$0xff]
      %v693 = vld [vmem:[%s3 + $0x6d8] sm:$0xff]
      %v694 = vld [vmem:[%s3 + $0x6e0] sm:$0xff]
      %v695 = vld [vmem:[%s3 + $0x6e8] sm:$0xff]
      %v696 = vld [vmem:[%s3 + $0x6f0] sm:$0xff]
      %v697 = vld [vmem:[%s3 + $0x6f8] sm:$0xff]
      %v698 = vld [vmem:[%s3 + $0x700] sm:$0xff]
      %v699 = vld [vmem:[%s3 + $0x708] sm:$0xff]
      %v700 = vld [vmem:[%s3 + $0x710] sm:$0xff]
      %v701 = vld [vmem:[%s3 + $0x718] sm:$0xff]
      %v702 = vld [vmem:[%s3 + $0x720] sm:$0xff]
      %v703 = vld [vmem:[%s3 + $0x728] sm:$0xff]
      %v704 = vld [vmem:[%s3 + $0x730] sm:$0xff]
      %v705 = vld [vmem:[%s3 + $0x738] sm:$0xff]
      %v706 = vld [vmem:[%s3 + $0x740] sm:$0xff]
      %v707 = vld [vmem:[%s3 + $0x748] sm:$0xff]
      %v708 = vld [vmem:[%s3 + $0x750] sm:$0xff]
      %v709 = vld [vmem:[%s3 + $0x758] sm:$0xff]
      %v710 = vld [vmem:[%s3 + $0x760] sm:$0xff]
      %v711 = vld [vmem:[%s3 + $0x768] sm:$0xff]
      %v712 = vld [vmem:[%s3 + $0x770] sm:$0xff]
      %v713 = vld [vmem:[%s3 + $0x778] sm:$0xff]
      %v714 = vld [vmem:[%s3 + $0x780] sm:$0xff]
      %v715 = vld [vmem:[%s3 + $0x788] sm:$0xff]
      %v716 = vld [vmem:[%s3 + $0x790] sm:$0xff]
      %v717 = vld [vmem:[%s3 + $0x798] sm:$0xff]
      %v718 = vld [vmem:[%s3 + $0x7a0] sm:$0xff]
      %v719 = vld [vmem:[%s3 + $0x7a8] sm:$0xff]
      %v720 = vld [vmem:[%s3 + $0x7b0] sm:$0xff]
      %v721 = vld [vmem:[%s3 + $0x7b8] sm:$0xff]
      %v722 = vld [vmem:[%s3 + $0x7c0] sm:$0xff]
      %v723 = vld [vmem:[%s3 + $0x7c8] sm:$0xff]
      %v724 = vld [vmem:[%s3 + $0x7d0] sm:$0xff]
      %v725 = vld [vmem:[%s3 + $0x7d8] sm:$0xff]
      %v726 = vld [vmem:[%s3 + $0x7e0] sm:$0xff]
      %v727 = vld [vmem:[%s3 + $0x7e8] sm:$0xff]
      %v728 = vld [vmem:[%s3 + $0x7f0] sm:$0xff]
      %v729 = vld [vmem:[%s3 + $0x7f8] sm:$0xff]
      %v730 = vld [vmem:[%s3 + $0x800] sm:$0xff]
      %v731 = vld [vmem:[%s3 + $0x808] sm:$0xff]
      %v732 = vld [vmem:[%s3 + $0x810] sm:$0xff]
      %v733 = vld [vmem:[%s3 + $0x818] sm:$0xff]
      %v734 = vld [vmem:[%s3 + $0x820] sm:$0xff]
      %v735 = vld [vmem:[%s3 + $0x828] sm:$0xff]
      %v736 = vld [vmem:[%s3 + $0x830] sm:$0xff]
      %v737 = vld [vmem:[%s3 + $0x838] sm:$0xff]
      %v738 = vld [vmem:[%s3 + $0x840] sm:$0xff]
      %v739 = vld [vmem:[%s3 + $0x848] sm:$0xff]
      %v740 = vld [vmem:[%s3 + $0x850] sm:$0xff]
      %v741 = vld [vmem:[%s3 + $0x858] sm:$0xff]
      %v742 = vld [vmem:[%s3 + $0x860] sm:$0xff]
      %v743 = vld [vmem:[%s3 + $0x868] sm:$0xff]
      %v744 = vld [vmem:[%s3 + $0x870] sm:$0xff]
      %v745 = vld [vmem:[%s3 + $0x878] sm:$0xff]
      %v746 = vld [vmem:[%s3 + $0x880] sm:$0xff]
      %v747 = vld [vmem:[%s3 + $0x888] sm:$0xff]
      %v748 = vld [vmem:[%s3 + $0x890] sm:$0xff]
      %v749 = vld [vmem:[%s3 + $0x898] sm:$0xff]
      %v750 = vld [vmem:[%s3 + $0x8a0] sm:$0xff]
      %v751 = vld [vmem:[%s3 + $0x8a8] sm:$0xff]
      %v752 = vld [vmem:[%s3 + $0x8b0] sm:$0xff]
      %v753 = vld [vmem:[%s3 + $0x8b8] sm:$0xff]
      %v754 = vld [vmem:[%s3 + $0x8c0] sm:$0xff]
      %v755 = vld [vmem:[%s3 + $0x8c8] sm:$0xff]
      %v756 = vld [vmem:[%s3 + $0x8d0] sm:$0xff]
      %v757 = vld [vmem:[%s3 + $0x8d8] sm:$0xff]
      %v758 = vld [vmem:[%s3 + $0x8e0] sm:$0xff]
      %v759 = vld [vmem:[%s3 + $0x8e8] sm:$0xff]
      %v760 = vld [vmem:[%s3 + $0x8f0] sm:$0xff]
      %v761 = vld [vmem:[%s3 + $0x8f8] sm:$0xff]
      %v762 = vld [vmem:[%s3 + $0x900] sm:$0xff]
      %v763 = vld [vmem:[%s3 + $0x908] sm:$0xff]
      %v764 = vld [vmem:[%s3 + $0x910] sm:$0xff]
      %v765 = vld [vmem:[%s3 + $0x918] sm:$0xff]
      %v766 = vld [vmem:[%s3 + $0x920] sm:$0xff]
      %v767 = vld [vmem:[%s3 + $0x928] sm:$0xff]
      %v768 = vld [vmem:[%s3 + $0x930] sm:$0xff]
      %v769 = vld [vmem:[%s3 + $0x938] sm:$0xff]
      %v770 = vld [vmem:[%s3 + $0x940] sm:$0xff]
      %v771 = vld [vmem:[%s3 + $0x948] sm:$0xff]
      %v772 = vld [vmem:[%s3 + $0x950] sm:$0xff]
      %v773 = vld [vmem:[%s3 + $0x958] sm:$0xff]
      %v774 = vld [vmem:[%s3 + $0x960] sm:$0xff]
      %v775 = vld [vmem:[%s3 + $0x968] sm:$0xff]
      %v776 = vld [vmem:[%s3 + $0x970] sm:$0xff]
      %v777 = vld [vmem:[%s3 + $0x978] sm:$0xff]
      %v778 = vld [vmem:[%s3 + $0x980] sm:$0xff]
      %v779 = vld [vmem:[%s3 + $0x988] sm:$0xff]
      %v780 = vld [vmem:[%s3 + $0x990] sm:$0xff]
      %v781 = vld [vmem:[%s3 + $0x998] sm:$0xff]
      %v782 = vld [vmem:[%s3 + $0x9a0] sm:$0xff]
      %v783 = vld [vmem:[%s3 + $0x9a8] sm:$0xff]
      %v784 = vld [vmem:[%s3 + $0x9b0] sm:$0xff]
      %v785 = vld [vmem:[%s3 + $0x9b8] sm:$0xff]
      %v786 = vld [vmem:[%s3 + $0x9c0] sm:$0xff]
      %v787 = vld [vmem:[%s3 + $0x9c8] sm:$0xff]
      %v788 = vld [vmem:[%s3 + $0x9d0] sm:$0xff]
      %v789 = vld [vmem:[%s3 + $0x9d8] sm:$0xff]
      %v790 = vld [vmem:[%s3 + $0x9e0] sm:$0xff]
      %v791 = vld [vmem:[%s3 + $0x9e8] sm:$0xff]
      %v792 = vld [vmem:[%s3 + $0x9f0] sm:$0xff]
      %v793 = vld [vmem:[%s3 + $0x9f8] sm:$0xff]
      %v794 = vld [vmem:[%s3 + $0xa00] sm:$0xff]
      %v795 = vld [vmem:[%s3 + $0xa08] sm:$0xff]
      %v796 = vld [vmem:[%s3 + $0xa10] sm:$0xff]
      %v797 = vld [vmem:[%s3 + $0xa18] sm:$0xff]
      %v798 = vld [vmem:[%s3 + $0xa20] sm:$0xff]
      %v799 = vld [vmem:[%s3 + $0xa28] sm:$0xff]
      %v800 = vld [vmem:[%s3 + $0xa30] sm:$0xff]
      %v801 = vld [vmem:[%s3 + $0xa38] sm:$0xff]
      %v802 = vld [vmem:[%s3 + $0xa40] sm:$0xff]
      %v803 = vld [vmem:[%s3 + $0xa48] sm:$0xff]
      %v804 = vld [vmem:[%s3 + $0xa50] sm:$0xff]
      %v805 = vld [vmem:[%s3 + $0xa58] sm:$0xff]
      %v806 = vld [vmem:[%s3 + $0xa60] sm:$0xff]
      %v807 = vld [vmem:[%s3 + $0xa68] sm:$0xff]
      %v808 = vld [vmem:[%s3 + $0xa70] sm:$0xff]
      %v809 = vld [vmem:[%s3 + $0xa78] sm:$0xff]
      %v810 = vld [vmem:[%s3 + $0xa80] sm:$0xff]
      %v811 = vld [vmem:[%s3 + $0xa88] sm:$0xff]
      %v812 = vld [vmem:[%s3 + $0xa90] sm:$0xff]
      %v813 = vld [vmem:[%s3 + $0xa98] sm:$0xff]
      %v814 = vld [vmem:[%s3 + $0xaa0] sm:$0xff]
      %v815 = vld [vmem:[%s3 + $0xaa8] sm:$0xff]
      %v816 = vld [vmem:[%s3 + $0xab0] sm:$0xff]
      %v817 = vld [vmem:[%s3 + $0xab8] sm:$0xff]
      %v818 = vld [vmem:[%s3 + $0xac0] sm:$0xff]
      %v819 = vld [vmem:[%s3 + $0xac8] sm:$0xff]
      %v820 = vld [vmem:[%s3 + $0xad0] sm:$0xff]
      %v821 = vld [vmem:[%s3 + $0xad8] sm:$0xff]
      %v822 = vld [vmem:[%s3 + $0xae0] sm:$0xff]
      %v823 = vld [vmem:[%s3 + $0xae8] sm:$0xff]
      %v824 = vld [vmem:[%s3 + $0xaf0] sm:$0xff]
      %v825 = vld [vmem:[%s3 + $0xaf8] sm:$0xff]
      %v826 = vld [vmem:[%s3 + $0xb00] sm:$0xff]
      %v827 = vld [vmem:[%s3 + $0xb08] sm:$0xff]
      %v828 = vld [vmem:[%s3 + $0xb10] sm:$0xff]
      %v829 = vld [vmem:[%s3 + $0xb18] sm:$0xff]
      %v830 = vld [vmem:[%s3 + $0xb20] sm:$0xff]
      %v831 = vld [vmem:[%s3 + $0xb28] sm:$0xff]
      %v832 = vld [vmem:[%s3 + $0xb30] sm:$0xff]
      %v833 = vld [vmem:[%s3 + $0xb38] sm:$0xff]
      %v834 = vld [vmem:[%s3 + $0xb40] sm:$0xff]
      %v835 = vld [vmem:[%s3 + $0xb48] sm:$0xff]
      %v836 = vld [vmem:[%s3 + $0xb50] sm:$0xff]
      %v837 = vld [vmem:[%s3 + $0xb58] sm:$0xff]
      %v838 = vld [vmem:[%s3 + $0xb60] sm:$0xff]
      %v839 = vld [vmem:[%s3 + $0xb68] sm:$0xff]
      %v840 = vld [vmem:[%s3 + $0xb70] sm:$0xff]
      %v841 = vld [vmem:[%s3 + $0xb78] sm:$0xff]
      %v842 = vld [vmem:[%s3 + $0xb80] sm:$0xff]
      %v843 = vld [vmem:[%s3 + $0xb88] sm:$0xff]
      %v844 = vld [vmem:[%s3 + $0xb90] sm:$0xff]
      %v845 = vld [vmem:[%s3 + $0xb98] sm:$0xff]
      %v846 = vld [vmem:[%s3 + $0xba0] sm:$0xff]
      %v847 = vld [vmem:[%s3 + $0xba8] sm:$0xff]
      %v848 = vld [vmem:[%s3 + $0xbb0] sm:$0xff]
      %v849 = vld [vmem:[%s3 + $0xbb8] sm:$0xff]
      %v850 = vld [vmem:[%s3 + $0xbc0] sm:$0xff]
      %v851 = vld [vmem:[%s3 + $0xbc8] sm:$0xff]
      %v852 = vld [vmem:[%s3 + $0xbd0] sm:$0xff]
      %v853 = vld [vmem:[%s3 + $0xbd8] sm:$0xff]
      %v854 = vld [vmem:[%s3 + $0xbe0] sm:$0xff]
      %v855 = vld [vmem:[%s3 + $0xbe8] sm:$0xff]
      %v856 = vld [vmem:[%s3 + $0xbf0] sm:$0xff]
      %v857 = vld [vmem:[%s3 + $0xbf8] sm:$0xff]
      %v858 = vld [vmem:[%s3 + $0xc00] sm:$0xff]
      %v859 = vld [vmem:[%s3 + $0xc08] sm:$0xff]
      %v860 = vld [vmem:[%s3 + $0xc10] sm:$0xff]
      %v861 = vld [vmem:[%s3 + $0xc18] sm:$0xff]
      %v862 = vld [vmem:[%s3 + $0xc20] sm:$0xff]
      %v863 = vld [vmem:[%s3 + $0xc28] sm:$0xff]
      %v864 = vld [vmem:[%s3 + $0xc30] sm:$0xff]
      %v865 = vld [vmem:[%s3 + $0xc38] sm:$0xff]
      %v866 = vld [vmem:[%s3 + $0xc40] sm:$0xff]
      %v867 = vld [vmem:[%s3 + $0xc48] sm:$0xff]
      %v868 = vld [vmem:[%s3 + $0xc50] sm:$0xff]
      %v869 = vld [vmem:[%s3 + $0xc58] sm:$0xff]
      %v870 = vld [vmem:[%s3 + $0xc60] sm:$0xff]
      %v871 = vld [vmem:[%s3 + $0xc68] sm:$0xff]
      %v872 = vld [vmem:[%s3 + $0xc70] sm:$0xff]
      %v873 = vld [vmem:[%s3 + $0xc78] sm:$0xff]
      %v874 = vld [vmem:[%s3 + $0xc80] sm:$0xff]
      %v875 = vld [vmem:[%s3 + $0xc88] sm:$0xff]
      %v876 = vld [vmem:[%s3 + $0xc90] sm:$0xff]
      %v877 = vld [vmem:[%s3 + $0xc98] sm:$0xff]
      %v878 = vld [vmem:[%s3 + $0xca0] sm:$0xff]
      %v879 = vld [vmem:[%s3 + $0xca8] sm:$0xff]
      %v880 = vld [vmem:[%s3 + $0xcb0] sm:$0xff]
      %v881 = vld [vmem:[%s3 + $0xcb8] sm:$0xff]
      %v882 = vld [vmem:[%s3 + $0xcc0] sm:$0xff]
      %v883 = vld [vmem:[%s3 + $0xcc8] sm:$0xff]
      %v884 = vld [vmem:[%s3 + $0xcd0] sm:$0xff]
      %v885 = vld [vmem:[%s3 + $0xcd8] sm:$0xff]
      %v886 = vld [vmem:[%s3 + $0xce0] sm:$0xff]
      %v887 = vld [vmem:[%s3 + $0xce8] sm:$0xff]
      %v888 = vld [vmem:[%s3 + $0xcf0] sm:$0xff]
      %v889 = vld [vmem:[%s3 + $0xcf8] sm:$0xff]
      %v890 = vld [vmem:[%s3 + $0xd00] sm:$0xff]
      %v891 = vld [vmem:[%s3 + $0xd08] sm:$0xff]
      %v892 = vld [vmem:[%s3 + $0xd10] sm:$0xff]
      %v893 = vld [vmem:[%s3 + $0xd18] sm:$0xff]
      %v894 = vld [vmem:[%s3 + $0xd20] sm:$0xff]
      %v895 = vld [vmem:[%s3 + $0xd28] sm:$0xff]
      %v896 = vld [vmem:[%s3 + $0xd30] sm:$0xff]
      %v897 = vld [vmem:[%s3 + $0xd38] sm:$0xff]
      %v898 = vld [vmem:[%s3 + $0xd40] sm:$0xff]
      %v899 = vld [vmem:[%s3 + $0xd48] sm:$0xff]
      %v900 = vld [vmem:[%s3 + $0xd50] sm:$0xff]
      %v901 = vld [vmem:[%s3 + $0xd58] sm:$0xff]
      %v902 = vld [vmem:[%s3 + $0xd60] sm:$0xff]
      %v903 = vld [vmem:[%s3 + $0xd68] sm:$0xff]
      %v904 = vld [vmem:[%s3 + $0xd70] sm:$0xff]
      %v905 = vld [vmem:[%s3 + $0xd78] sm:$0xff]
      %v906 = vld [vmem:[%s3 + $0xd80] sm:$0xff]
      %v907 = vld [vmem:[%s3 + $0xd88] sm:$0xff]
      %v908 = vld [vmem:[%s3 + $0xd90] sm:$0xff]
      %v909 = vld [vmem:[%s3 + $0xd98] sm:$0xff]
      %v910 = vld [vmem:[%s3 + $0xda0] sm:$0xff]
      %v911 = vld [vmem:[%s3 + $0xda8] sm:$0xff]
      %v912 = vld [vmem:[%s3 + $0xdb0] sm:$0xff]
      %v913 = vld [vmem:[%s3 + $0xdb8] sm:$0xff]
      %v914 = vld [vmem:[%s3 + $0xdc0] sm:$0xff]
      %v915 = vld [vmem:[%s3 + $0xdc8] sm:$0xff]
      %v916 = vld [vmem:[%s3 + $0xdd0] sm:$0xff]
      %v917 = vld [vmem:[%s3 + $0xdd8] sm:$0xff]
      %v918 = vld [vmem:[%s3 + $0xde0] sm:$0xff]
      %v919 = vld [vmem:[%s3 + $0xde8] sm:$0xff]
      %v920 = vld [vmem:[%s3 + $0xdf0] sm:$0xff]
      %v921 = vld [vmem:[%s3 + $0xdf8] sm:$0xff]
      %v922 = vld [vmem:[%s4] sm:$0x7f]
      %v924 = vperm.slane %v922, 0
      %v925 = vperm.slane %v922, 1
      %v926 = vperm.slane %v922, 2
      %v927 = vperm.slane %v922, 3
      %v928 = vperm.slane %v922, 4
      %v929 = vperm.slane %v922, 5
      %v930 = vperm.slane %v922, 6
      %938 = vmatpush.msra.mxu0 %v579
      %939 = vmatpush.msra.mxu0 %v572
      %940 = vmatpush.msra.mxu0 %v565
      %941 = vmatpush.msra.mxu0 %v558
      %942 = vmatpush.msra.mxu0 %v551
      %943 = vmatpush.msra.mxu0 %v544
      %944 = vmatpush.msra.mxu0 %v537
      %945 = vmatpush.msra.mxu0 %v530
      %946 = vmatpush.msra.mxu0 %v523
      %947 = vmatpush.msra.mxu0 %v516
      %948 = vmatpush.msra.mxu0 %v509
      %949 = vmatpush.msra.mxu0 %v502
      %950 = vmatpush.msra.mxu0 %v495
      %951 = vmatpush.msra.mxu0 %v488
      %952 = vmatpush.msra.mxu0 %v481
      %953 = vmatpush.msra.mxu0 %v474
      %954 = vmatmul.f32.gmra.mxu0 %v446
      %v955 = vpop.f32.mrf.mxu0
      %v956 = vadd.f32 %v924, %v955
      %957 = vmatmul.f32.gmra.mxu0 %v450
      %v958 = vpop.f32.mrf.mxu0
      %v959 = vadd.f32 %v924, %v958
      %960 = vmatmul.f32.gmra.mxu0 %v454
      %v961 = vpop.f32.mrf.mxu0
      %v962 = vadd.f32 %v924, %v961
      %963 = vmatmul.f32.gmra.mxu0 %v458
      %v964 = vpop.f32.mrf.mxu0
      %v965 = vadd.f32 %v924, %v964
      %966 = vmatmul.f32.gmra.mxu0 %v462
      %v967 = vpop.f32.mrf.mxu0
      %v968 = vadd.f32 %v924, %v967
      %969 = vmatmul.f32.gmra.mxu0 %v466
      %v970 = vpop.f32.mrf.mxu0
      %v971 = vadd.f32 %v924, %v970
      %972 = vmatmul.f32.gmra.mxu0 %v470
      %v973 = vpop.f32.mrf.mxu0
      %v974 = vadd.f32 %v924, %v973
      %975 = vdwg.mxu0
      %976 = vmatpush.msra.mxu0 %v691
      %977 = vmatpush.msra.mxu0 %v684
      %978 = vmatpush.msra.mxu0 %v677
      %979 = vmatpush.msra.mxu0 %v670
      %980 = vmatpush.msra.mxu0 %v663
      %981 = vmatpush.msra.mxu0 %v656
      %982 = vmatpush.msra.mxu0 %v649
      %983 = vmatpush.msra.mxu0 %v642
      %984 = vmatpush.msra.mxu0 %v635
      %985 = vmatpush.msra.mxu0 %v628
      %986 = vmatpush.msra.mxu0 %v621
      %987 = vmatpush.msra.mxu0 %v614
      %988 = vmatpush.msra.mxu0 %v607
      %989 = vmatpush.msra.mxu0 %v600
      %990 = vmatpush.msra.mxu0 %v593
      %991 = vmatpush.msra.mxu0 %v586
      %992 = vmatmul.f32.gmra.mxu0 %v447
      %v993 = vpop.f32.mrf.mxu0
      %v994 = vadd.f32 %v956, %v993
      %995 = vmatmul.f32.gmra.mxu0 %v451
      %v996 = vpop.f32.mrf.mxu0
      %v997 = vadd.f32 %v959, %v996
      %998 = vmatmul.f32.gmra.mxu0 %v455
      %v999 = vpop.f32.mrf.mxu0
      %v1000 = vadd.f32 %v962, %v999
      %1001 = vmatmul.f32.gmra.mxu0 %v459
      %v1002 = vpop.f32.mrf.mxu0
      %v1003 = vadd.f32 %v965, %v1002
      %1004 = vmatmul.f32.gmra.mxu0 %v463
      %v1005 = vpop.f32.mrf.mxu0
      %v1006 = vadd.f32 %v968, %v1005
      %1007 = vmatmul.f32.gmra.mxu0 %v467
      %v1008 = vpop.f32.mrf.mxu0
      %v1009 = vadd.f32 %v971, %v1008
      %1010 = vmatmul.f32.gmra.mxu0 %v471
      %v1011 = vpop.f32.mrf.mxu0
      %v1012 = vadd.f32 %v974, %v1011
      %1013 = vdwg.mxu0
      %1014 = vmatpush.msra.mxu0 %v803
      %1015 = vmatpush.msra.mxu0 %v796
      %1016 = vmatpush.msra.mxu0 %v789
      %1017 = vmatpush.msra.mxu0 %v782
      %1018 = vmatpush.msra.mxu0 %v775
      %1019 = vmatpush.msra.mxu0 %v768
      %1020 = vmatpush.msra.mxu0 %v761
      %1021 = vmatpush.msra.mxu0 %v754
      %1022 = vmatpush.msra.mxu0 %v747
      %1023 = vmatpush.msra.mxu0 %v740
      %1024 = vmatpush.msra.mxu0 %v733
      %1025 = vmatpush.msra.mxu0 %v726
      %1026 = vmatpush.msra.mxu0 %v719
      %1027 = vmatpush.msra.mxu0 %v712
      %1028 = vmatpush.msra.mxu0 %v705
      %1029 = vmatpush.msra.mxu0 %v698
      %1030 = vmatmul.f32.gmra.mxu0 %v448
      %v1031 = vpop.f32.mrf.mxu0
      %v1032 = vadd.f32 %v994, %v1031
      %1033 = vmatmul.f32.gmra.mxu0 %v452
      %v1034 = vpop.f32.mrf.mxu0
      %v1035 = vadd.f32 %v997, %v1034
      %1036 = vmatmul.f32.gmra.mxu0 %v456
      %v1037 = vpop.f32.mrf.mxu0
      %v1038 = vadd.f32 %v1000, %v1037
      %1039 = vmatmul.f32.gmra.mxu0 %v460
      %v1040 = vpop.f32.mrf.mxu0
      %v1041 = vadd.f32 %v1003, %v1040
      %1042 = vmatmul.f32.gmra.mxu0 %v464
      %v1043 = vpop.f32.mrf.mxu0
      %v1044 = vadd.f32 %v1006, %v1043
      %1045 = vmatmul.f32.gmra.mxu0 %v468
      %v1046 = vpop.f32.mrf.mxu0
      %v1047 = vadd.f32 %v1009, %v1046
      %1048 = vmatmul.f32.gmra.mxu0 %v472
      %v1049 = vpop.f32.mrf.mxu0
      %v1050 = vadd.f32 %v1012, %v1049
      %1051 = vdwg.mxu0
      %1052 = vmatpush.msra.mxu0 %v915
      %1053 = vmatpush.msra.mxu0 %v908
      %1054 = vmatpush.msra.mxu0 %v901
      %1055 = vmatpush.msra.mxu0 %v894
      %1056 = vmatpush.msra.mxu0 %v887
      %1057 = vmatpush.msra.mxu0 %v880
      %1058 = vmatpush.msra.mxu0 %v873
      %1059 = vmatpush.msra.mxu0 %v866
      %1060 = vmatpush.msra.mxu0 %v859
      %1061 = vmatpush.msra.mxu0 %v852
      %1062 = vmatpush.msra.mxu0 %v845
      %1063 = vmatpush.msra.mxu0 %v838
      %1064 = vmatpush.msra.mxu0 %v831
      %1065 = vmatpush.msra.mxu0 %v824
      %1066 = vmatpush.msra.mxu0 %v817
      %1067 = vmatpush.msra.mxu0 %v810
      %1068 = vmatmul.f32.gmra.mxu0 %v449
      %v1069 = vpop.f32.mrf.mxu0
      %v1070 = vadd.f32 %v1032, %v1069
      %1071 = vmatmul.f32.gmra.mxu0 %v453
      %v1072 = vpop.f32.mrf.mxu0
      %v1073 = vadd.f32 %v1035, %v1072
      %1074 = vmatmul.f32.gmra.mxu0 %v457
      %v1075 = vpop.f32.mrf.mxu0
      %v1076 = vadd.f32 %v1038, %v1075
      %1077 = vmatmul.f32.gmra.mxu0 %v461
      %v1078 = vpop.f32.mrf.mxu0
      %v1079 = vadd.f32 %v1041, %v1078
      %1080 = vmatmul.f32.gmra.mxu0 %v465
      %v1081 = vpop.f32.mrf.mxu0
      %v1082 = vadd.f32 %v1044, %v1081
      %1083 = vmatmul.f32.gmra.mxu0 %v469
      %v1084 = vpop.f32.mrf.mxu0
      %v1085 = vadd.f32 %v1047, %v1084
      %1086 = vmatmul.f32.gmra.mxu0 %v473
      %v1087 = vpop.f32.mrf.mxu0
      %v1088 = vadd.f32 %v1050, %v1087
      %1089 = vdwg.mxu0
      %1090 = vmatpush.msra.mxu0 %v580
      %1091 = vmatpush.msra.mxu0 %v573
      %1092 = vmatpush.msra.mxu0 %v566
      %1093 = vmatpush.msra.mxu0 %v559
      %1094 = vmatpush.msra.mxu0 %v552
      %1095 = vmatpush.msra.mxu0 %v545
      %1096 = vmatpush.msra.mxu0 %v538
      %1097 = vmatpush.msra.mxu0 %v531
      %1098 = vmatpush.msra.mxu0 %v524
      %1099 = vmatpush.msra.mxu0 %v517
      %1100 = vmatpush.msra.mxu0 %v510
      %1101 = vmatpush.msra.mxu0 %v503
      %1102 = vmatpush.msra.mxu0 %v496
      %1103 = vmatpush.msra.mxu0 %v489
      %1104 = vmatpush.msra.mxu0 %v482
      %1105 = vmatpush.msra.mxu0 %v475
      %1106 = vmatmul.f32.gmra.mxu0 %v446
      %v1107 = vpop.f32.mrf.mxu0
      %v1108 = vadd.f32 %v925, %v1107
      %1109 = vmatmul.f32.gmra.mxu0 %v450
      %v1110 = vpop.f32.mrf.mxu0
      %v1111 = vadd.f32 %v925, %v1110
      %1112 = vmatmul.f32.gmra.mxu0 %v454
      %v1113 = vpop.f32.mrf.mxu0
      %v1114 = vadd.f32 %v925, %v1113
      %1115 = vmatmul.f32.gmra.mxu0 %v458
      %v1116 = vpop.f32.mrf.mxu0
      %v1117 = vadd.f32 %v925, %v1116
      %1118 = vmatmul.f32.gmra.mxu0 %v462
      %v1119 = vpop.f32.mrf.mxu0
      %v1120 = vadd.f32 %v925, %v1119
      %1121 = vmatmul.f32.gmra.mxu0 %v466
      %v1122 = vpop.f32.mrf.mxu0
      %v1123 = vadd.f32 %v925, %v1122
      %1124 = vmatmul.f32.gmra.mxu0 %v470
      %v1125 = vpop.f32.mrf.mxu0
      %v1126 = vadd.f32 %v925, %v1125
      %1127 = vdwg.mxu0
      %1128 = vmatpush.msra.mxu0 %v692
      %1129 = vmatpush.msra.mxu0 %v685
      %1130 = vmatpush.msra.mxu0 %v678
      %1131 = vmatpush.msra.mxu0 %v671
      %1132 = vmatpush.msra.mxu0 %v664
      %1133 = vmatpush.msra.mxu0 %v657
      %1134 = vmatpush.msra.mxu0 %v650
      %1135 = vmatpush.msra.mxu0 %v643
      %1136 = vmatpush.msra.mxu0 %v636
      %1137 = vmatpush.msra.mxu0 %v629
      %1138 = vmatpush.msra.mxu0 %v622
      %1139 = vmatpush.msra.mxu0 %v615
      %1140 = vmatpush.msra.mxu0 %v608
      %1141 = vmatpush.msra.mxu0 %v601
      %1142 = vmatpush.msra.mxu0 %v594
      %1143 = vmatpush.msra.mxu0 %v587
      %1144 = vmatmul.f32.gmra.mxu0 %v447
      %v1145 = vpop.f32.mrf.mxu0
      %v1146 = vadd.f32 %v1108, %v1145
      %1147 = vmatmul.f32.gmra.mxu0 %v451
      %v1148 = vpop.f32.mrf.mxu0
      %v1149 = vadd.f32 %v1111, %v1148
      %1150 = vmatmul.f32.gmra.mxu0 %v455
      %v1151 = vpop.f32.mrf.mxu0
      %v1152 = vadd.f32 %v1114, %v1151
      %1153 = vmatmul.f32.gmra.mxu0 %v459
      %v1154 = vpop.f32.mrf.mxu0
      %v1155 = vadd.f32 %v1117, %v1154
      %1156 = vmatmul.f32.gmra.mxu0 %v463
      %v1157 = vpop.f32.mrf.mxu0
      %v1158 = vadd.f32 %v1120, %v1157
      %1159 = vmatmul.f32.gmra.mxu0 %v467
      %v1160 = vpop.f32.mrf.mxu0
      %v1161 = vadd.f32 %v1123, %v1160
      %1162 = vmatmul.f32.gmra.mxu0 %v471
      %v1163 = vpop.f32.mrf.mxu0
      %v1164 = vadd.f32 %v1126, %v1163
      %1165 = vdwg.mxu0
      %1166 = vmatpush.msra.mxu0 %v804
      %1167 = vmatpush.msra.mxu0 %v797
      %1168 = vmatpush.msra.mxu0 %v790
      %1169 = vmatpush.msra.mxu0 %v783
      %1170 = vmatpush.msra.mxu0 %v776
      %1171 = vmatpush.msra.mxu0 %v769
      %1172 = vmatpush.msra.mxu0 %v762
      %1173 = vmatpush.msra.mxu0 %v755
      %1174 = vmatpush.msra.mxu0 %v748
      %1175 = vmatpush.msra.mxu0 %v741
      %1176 = vmatpush.msra.mxu0 %v734
      %1177 = vmatpush.msra.mxu0 %v727
      %1178 = vmatpush.msra.mxu0 %v720
      %1179 = vmatpush.msra.mxu0 %v713
      %1180 = vmatpush.msra.mxu0 %v706
      %1181 = vmatpush.msra.mxu0 %v699
      %1182 = vmatmul.f32.gmra.mxu0 %v448
      %v1183 = vpop.f32.mrf.mxu0
      %v1184 = vadd.f32 %v1146, %v1183
      %1185 = vmatmul.f32.gmra.mxu0 %v452
      %v1186 = vpop.f32.mrf.mxu0
      %v1187 = vadd.f32 %v1149, %v1186
      %1188 = vmatmul.f32.gmra.mxu0 %v456
      %v1189 = vpop.f32.mrf.mxu0
      %v1190 = vadd.f32 %v1152, %v1189
      %1191 = vmatmul.f32.gmra.mxu0 %v460
      %v1192 = vpop.f32.mrf.mxu0
      %v1193 = vadd.f32 %v1155, %v1192
      %1194 = vmatmul.f32.gmra.mxu0 %v464
      %v1195 = vpop.f32.mrf.mxu0
      %v1196 = vadd.f32 %v1158, %v1195
      %1197 = vmatmul.f32.gmra.mxu0 %v468
      %v1198 = vpop.f32.mrf.mxu0
      %v1199 = vadd.f32 %v1161, %v1198
      %1200 = vmatmul.f32.gmra.mxu0 %v472
      %v1201 = vpop.f32.mrf.mxu0
      %v1202 = vadd.f32 %v1164, %v1201
      %1203 = vdwg.mxu0
      %1204 = vmatpush.msra.mxu0 %v916
      %1205 = vmatpush.msra.mxu0 %v909
      %1206 = vmatpush.msra.mxu0 %v902
      %1207 = vmatpush.msra.mxu0 %v895
      %1208 = vmatpush.msra.mxu0 %v888
      %1209 = vmatpush.msra.mxu0 %v881
      %1210 = vmatpush.msra.mxu0 %v874
      %1211 = vmatpush.msra.mxu0 %v867
      %1212 = vmatpush.msra.mxu0 %v860
      %1213 = vmatpush.msra.mxu0 %v853
      %1214 = vmatpush.msra.mxu0 %v846
      %1215 = vmatpush.msra.mxu0 %v839
      %1216 = vmatpush.msra.mxu0 %v832
      %1217 = vmatpush.msra.mxu0 %v825
      %1218 = vmatpush.msra.mxu0 %v818
      %1219 = vmatpush.msra.mxu0 %v811
      %1220 = vmatmul.f32.gmra.mxu0 %v449
      %v1221 = vpop.f32.mrf.mxu0
      %v1222 = vadd.f32 %v1184, %v1221
      %1223 = vmatmul.f32.gmra.mxu0 %v453
      %v1224 = vpop.f32.mrf.mxu0
      %v1225 = vadd.f32 %v1187, %v1224
      %1226 = vmatmul.f32.gmra.mxu0 %v457
      %v1227 = vpop.f32.mrf.mxu0
      %v1228 = vadd.f32 %v1190, %v1227
      %1229 = vmatmul.f32.gmra.mxu0 %v461
      %v1230 = vpop.f32.mrf.mxu0
      %v1231 = vadd.f32 %v1193, %v1230
      %1232 = vmatmul.f32.gmra.mxu0 %v465
      %v1233 = vpop.f32.mrf.mxu0
      %v1234 = vadd.f32 %v1196, %v1233
      %1235 = vmatmul.f32.gmra.mxu0 %v469
      %v1236 = vpop.f32.mrf.mxu0
      %v1237 = vadd.f32 %v1199, %v1236
      %1238 = vmatmul.f32.gmra.mxu0 %v473
      %v1239 = vpop.f32.mrf.mxu0
      %v1240 = vadd.f32 %v1202, %v1239
      %1241 = vdwg.mxu0
      %1242 = vmatpush.msra.mxu0 %v581
      %1243 = vmatpush.msra.mxu0 %v574
      %1244 = vmatpush.msra.mxu0 %v567
      %1245 = vmatpush.msra.mxu0 %v560
      %1246 = vmatpush.msra.mxu0 %v553
      %1247 = vmatpush.msra.mxu0 %v546
      %1248 = vmatpush.msra.mxu0 %v539
      %1249 = vmatpush.msra.mxu0 %v532
      %1250 = vmatpush.msra.mxu0 %v525
      %1251 = vmatpush.msra.mxu0 %v518
      %1252 = vmatpush.msra.mxu0 %v511
      %1253 = vmatpush.msra.mxu0 %v504
      %1254 = vmatpush.msra.mxu0 %v497
      %1255 = vmatpush.msra.mxu0 %v490
      %1256 = vmatpush.msra.mxu0 %v483
      %1257 = vmatpush.msra.mxu0 %v476
      %1258 = vmatmul.f32.gmra.mxu0 %v446
      %v1259 = vpop.f32.mrf.mxu0
      %v1260 = vadd.f32 %v926, %v1259
      %1261 = vmatmul.f32.gmra.mxu0 %v450
      %v1262 = vpop.f32.mrf.mxu0
      %v1263 = vadd.f32 %v926, %v1262
      %1264 = vmatmul.f32.gmra.mxu0 %v454
      %v1265 = vpop.f32.mrf.mxu0
      %v1266 = vadd.f32 %v926, %v1265
      %1267 = vmatmul.f32.gmra.mxu0 %v458
      %v1268 = vpop.f32.mrf.mxu0
      %v1269 = vadd.f32 %v926, %v1268
      %1270 = vmatmul.f32.gmra.mxu0 %v462
      %v1271 = vpop.f32.mrf.mxu0
      %v1272 = vadd.f32 %v926, %v1271
      %1273 = vmatmul.f32.gmra.mxu0 %v466
      %v1274 = vpop.f32.mrf.mxu0
      %v1275 = vadd.f32 %v926, %v1274
      %1276 = vmatmul.f32.gmra.mxu0 %v470
      %v1277 = vpop.f32.mrf.mxu0
      %v1278 = vadd.f32 %v926, %v1277
      %1279 = vdwg.mxu0
      %1280 = vmatpush.msra.mxu0 %v693
      %1281 = vmatpush.msra.mxu0 %v686
      %1282 = vmatpush.msra.mxu0 %v679
      %1283 = vmatpush.msra.mxu0 %v672
      %1284 = vmatpush.msra.mxu0 %v665
      %1285 = vmatpush.msra.mxu0 %v658
      %1286 = vmatpush.msra.mxu0 %v651
      %1287 = vmatpush.msra.mxu0 %v644
      %1288 = vmatpush.msra.mxu0 %v637
      %1289 = vmatpush.msra.mxu0 %v630
      %1290 = vmatpush.msra.mxu0 %v623
      %1291 = vmatpush.msra.mxu0 %v616
      %1292 = vmatpush.msra.mxu0 %v609
      %1293 = vmatpush.msra.mxu0 %v602
      %1294 = vmatpush.msra.mxu0 %v595
      %1295 = vmatpush.msra.mxu0 %v588
      %1296 = vmatmul.f32.gmra.mxu0 %v447
      %v1297 = vpop.f32.mrf.mxu0
      %v1298 = vadd.f32 %v1260, %v1297
      %1299 = vmatmul.f32.gmra.mxu0 %v451
      %v1300 = vpop.f32.mrf.mxu0
      %v1301 = vadd.f32 %v1263, %v1300
      %1302 = vmatmul.f32.gmra.mxu0 %v455
      %v1303 = vpop.f32.mrf.mxu0
      %v1304 = vadd.f32 %v1266, %v1303
      %1305 = vmatmul.f32.gmra.mxu0 %v459
      %v1306 = vpop.f32.mrf.mxu0
      %v1307 = vadd.f32 %v1269, %v1306
      %1308 = vmatmul.f32.gmra.mxu0 %v463
      %v1309 = vpop.f32.mrf.mxu0
      %v1310 = vadd.f32 %v1272, %v1309
      %1311 = vmatmul.f32.gmra.mxu0 %v467
      %v1312 = vpop.f32.mrf.mxu0
      %v1313 = vadd.f32 %v1275, %v1312
      %1314 = vmatmul.f32.gmra.mxu0 %v471
      %v1315 = vpop.f32.mrf.mxu0
      %v1316 = vadd.f32 %v1278, %v1315
      %1317 = vdwg.mxu0
      %1318 = vmatpush.msra.mxu0 %v805
      %1319 = vmatpush.msra.mxu0 %v798
      %1320 = vmatpush.msra.mxu0 %v791
      %1321 = vmatpush.msra.mxu0 %v784
      %1322 = vmatpush.msra.mxu0 %v777
      %1323 = vmatpush.msra.mxu0 %v770
      %1324 = vmatpush.msra.mxu0 %v763
      %1325 = vmatpush.msra.mxu0 %v756
      %1326 = vmatpush.msra.mxu0 %v749
      %1327 = vmatpush.msra.mxu0 %v742
      %1328 = vmatpush.msra.mxu0 %v735
      %1329 = vmatpush.msra.mxu0 %v728
      %1330 = vmatpush.msra.mxu0 %v721
      %1331 = vmatpush.msra.mxu0 %v714
      %1332 = vmatpush.msra.mxu0 %v707
      %1333 = vmatpush.msra.mxu0 %v700
      %1334 = vmatmul.f32.gmra.mxu0 %v448
      %v1335 = vpop.f32.mrf.mxu0
      %v1336 = vadd.f32 %v1298, %v1335
      %1337 = vmatmul.f32.gmra.mxu0 %v452
      %v1338 = vpop.f32.mrf.mxu0
      %v1339 = vadd.f32 %v1301, %v1338
      %1340 = vmatmul.f32.gmra.mxu0 %v456
      %v1341 = vpop.f32.mrf.mxu0
      %v1342 = vadd.f32 %v1304, %v1341
      %1343 = vmatmul.f32.gmra.mxu0 %v460
      %v1344 = vpop.f32.mrf.mxu0
      %v1345 = vadd.f32 %v1307, %v1344
      %1346 = vmatmul.f32.gmra.mxu0 %v464
      %v1347 = vpop.f32.mrf.mxu0
      %v1348 = vadd.f32 %v1310, %v1347
      %1349 = vmatmul.f32.gmra.mxu0 %v468
      %v1350 = vpop.f32.mrf.mxu0
      %v1351 = vadd.f32 %v1313, %v1350
      %1352 = vmatmul.f32.gmra.mxu0 %v472
      %v1353 = vpop.f32.mrf.mxu0
      %v1354 = vadd.f32 %v1316, %v1353
      %1355 = vdwg.mxu0
      %1356 = vmatpush.msra.mxu0 %v917
      %1357 = vmatpush.msra.mxu0 %v910
      %1358 = vmatpush.msra.mxu0 %v903
      %1359 = vmatpush.msra.mxu0 %v896
      %1360 = vmatpush.msra.mxu0 %v889
      %1361 = vmatpush.msra.mxu0 %v882
      %1362 = vmatpush.msra.mxu0 %v875
      %1363 = vmatpush.msra.mxu0 %v868
      %1364 = vmatpush.msra.mxu0 %v861
      %1365 = vmatpush.msra.mxu0 %v854
      %1366 = vmatpush.msra.mxu0 %v847
      %1367 = vmatpush.msra.mxu0 %v840
      %1368 = vmatpush.msra.mxu0 %v833
      %1369 = vmatpush.msra.mxu0 %v826
      %1370 = vmatpush.msra.mxu0 %v819
      %1371 = vmatpush.msra.mxu0 %v812
      %1372 = vmatmul.f32.gmra.mxu0 %v449
      %v1373 = vpop.f32.mrf.mxu0
      %v1374 = vadd.f32 %v1336, %v1373
      %1375 = vmatmul.f32.gmra.mxu0 %v453
      %v1376 = vpop.f32.mrf.mxu0
      %v1377 = vadd.f32 %v1339, %v1376
      %1378 = vmatmul.f32.gmra.mxu0 %v457
      %v1379 = vpop.f32.mrf.mxu0
      %v1380 = vadd.f32 %v1342, %v1379
      %1381 = vmatmul.f32.gmra.mxu0 %v461
      %v1382 = vpop.f32.mrf.mxu0
      %v1383 = vadd.f32 %v1345, %v1382
      %1384 = vmatmul.f32.gmra.mxu0 %v465
      %v1385 = vpop.f32.mrf.mxu0
      %v1386 = vadd.f32 %v1348, %v1385
      %1387 = vmatmul.f32.gmra.mxu0 %v469
      %v1388 = vpop.f32.mrf.mxu0
      %v1389 = vadd.f32 %v1351, %v1388
      %1390 = vmatmul.f32.gmra.mxu0 %v473
      %v1391 = vpop.f32.mrf.mxu0
      %v1392 = vadd.f32 %v1354, %v1391
      %1393 = vdwg.mxu0
      %1394 = vmatpush.msra.mxu0 %v582
      %1395 = vmatpush.msra.mxu0 %v575
      %1396 = vmatpush.msra.mxu0 %v568
      %1397 = vmatpush.msra.mxu0 %v561
      %1398 = vmatpush.msra.mxu0 %v554
      %1399 = vmatpush.msra.mxu0 %v547
      %1400 = vmatpush.msra.mxu0 %v540
      %1401 = vmatpush.msra.mxu0 %v533
      %1402 = vmatpush.msra.mxu0 %v526
      %1403 = vmatpush.msra.mxu0 %v519
      %1404 = vmatpush.msra.mxu0 %v512
      %1405 = vmatpush.msra.mxu0 %v505
      %1406 = vmatpush.msra.mxu0 %v498
      %1407 = vmatpush.msra.mxu0 %v491
      %1408 = vmatpush.msra.mxu0 %v484
      %1409 = vmatpush.msra.mxu0 %v477
      %1410 = vmatmul.f32.gmra.mxu0 %v446
      %v1411 = vpop.f32.mrf.mxu0
      %v1412 = vadd.f32 %v927, %v1411
      %1413 = vmatmul.f32.gmra.mxu0 %v450
      %v1414 = vpop.f32.mrf.mxu0
      %v1415 = vadd.f32 %v927, %v1414
      %1416 = vmatmul.f32.gmra.mxu0 %v454
      %v1417 = vpop.f32.mrf.mxu0
      %v1418 = vadd.f32 %v927, %v1417
      %1419 = vmatmul.f32.gmra.mxu0 %v458
      %v1420 = vpop.f32.mrf.mxu0
      %v1421 = vadd.f32 %v927, %v1420
      %1422 = vmatmul.f32.gmra.mxu0 %v462
      %v1423 = vpop.f32.mrf.mxu0
      %v1424 = vadd.f32 %v927, %v1423
      %1425 = vmatmul.f32.gmra.mxu0 %v466
      %v1426 = vpop.f32.mrf.mxu0
      %v1427 = vadd.f32 %v927, %v1426
      %1428 = vmatmul.f32.gmra.mxu0 %v470
      %v1429 = vpop.f32.mrf.mxu0
      %v1430 = vadd.f32 %v927, %v1429
      %1431 = vdwg.mxu0
      %1432 = vmatpush.msra.mxu0 %v694
      %1433 = vmatpush.msra.mxu0 %v687
      %1434 = vmatpush.msra.mxu0 %v680
      %1435 = vmatpush.msra.mxu0 %v673
      %1436 = vmatpush.msra.mxu0 %v666
      %1437 = vmatpush.msra.mxu0 %v659
      %1438 = vmatpush.msra.mxu0 %v652
      %1439 = vmatpush.msra.mxu0 %v645
      %1440 = vmatpush.msra.mxu0 %v638
      %1441 = vmatpush.msra.mxu0 %v631
      %1442 = vmatpush.msra.mxu0 %v624
      %1443 = vmatpush.msra.mxu0 %v617
      %1444 = vmatpush.msra.mxu0 %v610
      %1445 = vmatpush.msra.mxu0 %v603
      %1446 = vmatpush.msra.mxu0 %v596
      %1447 = vmatpush.msra.mxu0 %v589
      %1448 = vmatmul.f32.gmra.mxu0 %v447
      %v1449 = vpop.f32.mrf.mxu0
      %v1450 = vadd.f32 %v1412, %v1449
      %1451 = vmatmul.f32.gmra.mxu0 %v451
      %v1452 = vpop.f32.mrf.mxu0
      %v1453 = vadd.f32 %v1415, %v1452
      %1454 = vmatmul.f32.gmra.mxu0 %v455
      %v1455 = vpop.f32.mrf.mxu0
      %v1456 = vadd.f32 %v1418, %v1455
      %1457 = vmatmul.f32.gmra.mxu0 %v459
      %v1458 = vpop.f32.mrf.mxu0
      %v1459 = vadd.f32 %v1421, %v1458
      %1460 = vmatmul.f32.gmra.mxu0 %v463
      %v1461 = vpop.f32.mrf.mxu0
      %v1462 = vadd.f32 %v1424, %v1461
      %1463 = vmatmul.f32.gmra.mxu0 %v467
      %v1464 = vpop.f32.mrf.mxu0
      %v1465 = vadd.f32 %v1427, %v1464
      %1466 = vmatmul.f32.gmra.mxu0 %v471
      %v1467 = vpop.f32.mrf.mxu0
      %v1468 = vadd.f32 %v1430, %v1467
      %1469 = vdwg.mxu0
      %1470 = vmatpush.msra.mxu0 %v806
      %1471 = vmatpush.msra.mxu0 %v799
      %1472 = vmatpush.msra.mxu0 %v792
      %1473 = vmatpush.msra.mxu0 %v785
      %1474 = vmatpush.msra.mxu0 %v778
      %1475 = vmatpush.msra.mxu0 %v771
      %1476 = vmatpush.msra.mxu0 %v764
      %1477 = vmatpush.msra.mxu0 %v757
      %1478 = vmatpush.msra.mxu0 %v750
      %1479 = vmatpush.msra.mxu0 %v743
      %1480 = vmatpush.msra.mxu0 %v736
      %1481 = vmatpush.msra.mxu0 %v729
      %1482 = vmatpush.msra.mxu0 %v722
      %1483 = vmatpush.msra.mxu0 %v715
      %1484 = vmatpush.msra.mxu0 %v708
      %1485 = vmatpush.msra.mxu0 %v701
      %1486 = vmatmul.f32.gmra.mxu0 %v448
      %v1487 = vpop.f32.mrf.mxu0
      %v1488 = vadd.f32 %v1450, %v1487
      %1489 = vmatmul.f32.gmra.mxu0 %v452
      %v1490 = vpop.f32.mrf.mxu0
      %v1491 = vadd.f32 %v1453, %v1490
      %1492 = vmatmul.f32.gmra.mxu0 %v456
      %v1493 = vpop.f32.mrf.mxu0
      %v1494 = vadd.f32 %v1456, %v1493
      %1495 = vmatmul.f32.gmra.mxu0 %v460
      %v1496 = vpop.f32.mrf.mxu0
      %v1497 = vadd.f32 %v1459, %v1496
      %1498 = vmatmul.f32.gmra.mxu0 %v464
      %v1499 = vpop.f32.mrf.mxu0
      %v1500 = vadd.f32 %v1462, %v1499
      %1501 = vmatmul.f32.gmra.mxu0 %v468
      %v1502 = vpop.f32.mrf.mxu0
      %v1503 = vadd.f32 %v1465, %v1502
      %1504 = vmatmul.f32.gmra.mxu0 %v472
      %v1505 = vpop.f32.mrf.mxu0
      %v1506 = vadd.f32 %v1468, %v1505
      %1507 = vdwg.mxu0
      %1508 = vmatpush.msra.mxu0 %v918
      %1509 = vmatpush.msra.mxu0 %v911
      %1510 = vmatpush.msra.mxu0 %v904
      %1511 = vmatpush.msra.mxu0 %v897
      %1512 = vmatpush.msra.mxu0 %v890
      %1513 = vmatpush.msra.mxu0 %v883
      %1514 = vmatpush.msra.mxu0 %v876
      %1515 = vmatpush.msra.mxu0 %v869
      %1516 = vmatpush.msra.mxu0 %v862
      %1517 = vmatpush.msra.mxu0 %v855
      %1518 = vmatpush.msra.mxu0 %v848
      %1519 = vmatpush.msra.mxu0 %v841
      %1520 = vmatpush.msra.mxu0 %v834
      %1521 = vmatpush.msra.mxu0 %v827
      %1522 = vmatpush.msra.mxu0 %v820
      %1523 = vmatpush.msra.mxu0 %v813
      %1524 = vmatmul.f32.gmra.mxu0 %v449
      %v1525 = vpop.f32.mrf.mxu0
      %v1526 = vadd.f32 %v1488, %v1525
      %1527 = vmatmul.f32.gmra.mxu0 %v453
      %v1528 = vpop.f32.mrf.mxu0
      %v1529 = vadd.f32 %v1491, %v1528
      %1530 = vmatmul.f32.gmra.mxu0 %v457
      %v1531 = vpop.f32.mrf.mxu0
      %v1532 = vadd.f32 %v1494, %v1531
      %1533 = vmatmul.f32.gmra.mxu0 %v461
      %v1534 = vpop.f32.mrf.mxu0
      %v1535 = vadd.f32 %v1497, %v1534
      %1536 = vmatmul.f32.gmra.mxu0 %v465
      %v1537 = vpop.f32.mrf.mxu0
      %v1538 = vadd.f32 %v1500, %v1537
      %1539 = vmatmul.f32.gmra.mxu0 %v469
      %v1540 = vpop.f32.mrf.mxu0
      %v1541 = vadd.f32 %v1503, %v1540
      %1542 = vmatmul.f32.gmra.mxu0 %v473
      %v1543 = vpop.f32.mrf.mxu0
      %v1544 = vadd.f32 %v1506, %v1543
      %1545 = vdwg.mxu0
      %1546 = vmatpush.msra.mxu0 %v583
      %1547 = vmatpush.msra.mxu0 %v576
      %1548 = vmatpush.msra.mxu0 %v569
      %1549 = vmatpush.msra.mxu0 %v562
      %1550 = vmatpush.msra.mxu0 %v555
      %1551 = vmatpush.msra.mxu0 %v548
      %1552 = vmatpush.msra.mxu0 %v541
      %1553 = vmatpush.msra.mxu0 %v534
      %1554 = vmatpush.msra.mxu0 %v527
      %1555 = vmatpush.msra.mxu0 %v520
      %1556 = vmatpush.msra.mxu0 %v513
      %1557 = vmatpush.msra.mxu0 %v506
      %1558 = vmatpush.msra.mxu0 %v499
      %1559 = vmatpush.msra.mxu0 %v492
      %1560 = vmatpush.msra.mxu0 %v485
      %1561 = vmatpush.msra.mxu0 %v478
      %1562 = vmatmul.f32.gmra.mxu0 %v446
      %v1563 = vpop.f32.mrf.mxu0
      %v1564 = vadd.f32 %v928, %v1563
      %1565 = vmatmul.f32.gmra.mxu0 %v450
      %v1566 = vpop.f32.mrf.mxu0
      %v1567 = vadd.f32 %v928, %v1566
      %1568 = vmatmul.f32.gmra.mxu0 %v454
      %v1569 = vpop.f32.mrf.mxu0
      %v1570 = vadd.f32 %v928, %v1569
      %1571 = vmatmul.f32.gmra.mxu0 %v458
      %v1572 = vpop.f32.mrf.mxu0
      %v1573 = vadd.f32 %v928, %v1572
      %1574 = vmatmul.f32.gmra.mxu0 %v462
      %v1575 = vpop.f32.mrf.mxu0
      %v1576 = vadd.f32 %v928, %v1575
      %1577 = vmatmul.f32.gmra.mxu0 %v466
      %v1578 = vpop.f32.mrf.mxu0
      %v1579 = vadd.f32 %v928, %v1578
      %1580 = vmatmul.f32.gmra.mxu0 %v470
      %v1581 = vpop.f32.mrf.mxu0
      %v1582 = vadd.f32 %v928, %v1581
      %1583 = vdwg.mxu0
      %1584 = vmatpush.msra.mxu0 %v695
      %1585 = vmatpush.msra.mxu0 %v688
      %1586 = vmatpush.msra.mxu0 %v681
      %1587 = vmatpush.msra.mxu0 %v674
      %1588 = vmatpush.msra.mxu0 %v667
      %1589 = vmatpush.msra.mxu0 %v660
      %1590 = vmatpush.msra.mxu0 %v653
      %1591 = vmatpush.msra.mxu0 %v646
      %1592 = vmatpush.msra.mxu0 %v639
      %1593 = vmatpush.msra.mxu0 %v632
      %1594 = vmatpush.msra.mxu0 %v625
      %1595 = vmatpush.msra.mxu0 %v618
      %1596 = vmatpush.msra.mxu0 %v611
      %1597 = vmatpush.msra.mxu0 %v604
      %1598 = vmatpush.msra.mxu0 %v597
      %1599 = vmatpush.msra.mxu0 %v590
      %1600 = vmatmul.f32.gmra.mxu0 %v447
      %v1601 = vpop.f32.mrf.mxu0
      %v1602 = vadd.f32 %v1564, %v1601
      %1603 = vmatmul.f32.gmra.mxu0 %v451
      %v1604 = vpop.f32.mrf.mxu0
      %v1605 = vadd.f32 %v1567, %v1604
      %1606 = vmatmul.f32.gmra.mxu0 %v455
      %v1607 = vpop.f32.mrf.mxu0
      %v1608 = vadd.f32 %v1570, %v1607
      %1609 = vmatmul.f32.gmra.mxu0 %v459
      %v1610 = vpop.f32.mrf.mxu0
      %v1611 = vadd.f32 %v1573, %v1610
      %1612 = vmatmul.f32.gmra.mxu0 %v463
      %v1613 = vpop.f32.mrf.mxu0
      %v1614 = vadd.f32 %v1576, %v1613
      %1615 = vmatmul.f32.gmra.mxu0 %v467
      %v1616 = vpop.f32.mrf.mxu0
      %v1617 = vadd.f32 %v1579, %v1616
      %1618 = vmatmul.f32.gmra.mxu0 %v471
      %v1619 = vpop.f32.mrf.mxu0
      %v1620 = vadd.f32 %v1582, %v1619
      %1621 = vdwg.mxu0
      %1622 = vmatpush.msra.mxu0 %v807
      %1623 = vmatpush.msra.mxu0 %v800
      %1624 = vmatpush.msra.mxu0 %v793
      %1625 = vmatpush.msra.mxu0 %v786
      %1626 = vmatpush.msra.mxu0 %v779
      %1627 = vmatpush.msra.mxu0 %v772
      %1628 = vmatpush.msra.mxu0 %v765
      %1629 = vmatpush.msra.mxu0 %v758
      %1630 = vmatpush.msra.mxu0 %v751
      %1631 = vmatpush.msra.mxu0 %v744
      %1632 = vmatpush.msra.mxu0 %v737
      %1633 = vmatpush.msra.mxu0 %v730
      %1634 = vmatpush.msra.mxu0 %v723
      %1635 = vmatpush.msra.mxu0 %v716
      %1636 = vmatpush.msra.mxu0 %v709
      %1637 = vmatpush.msra.mxu0 %v702
      %1638 = vmatmul.f32.gmra.mxu0 %v448
      %v1639 = vpop.f32.mrf.mxu0
      %v1640 = vadd.f32 %v1602, %v1639
      %1641 = vmatmul.f32.gmra.mxu0 %v452
      %v1642 = vpop.f32.mrf.mxu0
      %v1643 = vadd.f32 %v1605, %v1642
      %1644 = vmatmul.f32.gmra.mxu0 %v456
      %v1645 = vpop.f32.mrf.mxu0
      %v1646 = vadd.f32 %v1608, %v1645
      %1647 = vmatmul.f32.gmra.mxu0 %v460
      %v1648 = vpop.f32.mrf.mxu0
      %v1649 = vadd.f32 %v1611, %v1648
      %1650 = vmatmul.f32.gmra.mxu0 %v464
      %v1651 = vpop.f32.mrf.mxu0
      %v1652 = vadd.f32 %v1614, %v1651
      %1653 = vmatmul.f32.gmra.mxu0 %v468
      %v1654 = vpop.f32.mrf.mxu0
      %v1655 = vadd.f32 %v1617, %v1654
      %1656 = vmatmul.f32.gmra.mxu0 %v472
      %v1657 = vpop.f32.mrf.mxu0
      %v1658 = vadd.f32 %v1620, %v1657
      %1659 = vdwg.mxu0
      %1660 = vmatpush.msra.mxu0 %v919
      %1661 = vmatpush.msra.mxu0 %v912
      %1662 = vmatpush.msra.mxu0 %v905
      %1663 = vmatpush.msra.mxu0 %v898
      %1664 = vmatpush.msra.mxu0 %v891
      %1665 = vmatpush.msra.mxu0 %v884
      %1666 = vmatpush.msra.mxu0 %v877
      %1667 = vmatpush.msra.mxu0 %v870
      %1668 = vmatpush.msra.mxu0 %v863
      %1669 = vmatpush.msra.mxu0 %v856
      %1670 = vmatpush.msra.mxu0 %v849
      %1671 = vmatpush.msra.mxu0 %v842
      %1672 = vmatpush.msra.mxu0 %v835
      %1673 = vmatpush.msra.mxu0 %v828
      %1674 = vmatpush.msra.mxu0 %v821
      %1675 = vmatpush.msra.mxu0 %v814
      %1676 = vmatmul.f32.gmra.mxu0 %v449
      %v1677 = vpop.f32.mrf.mxu0
      %v1678 = vadd.f32 %v1640, %v1677
      %1679 = vmatmul.f32.gmra.mxu0 %v453
      %v1680 = vpop.f32.mrf.mxu0
      %v1681 = vadd.f32 %v1643, %v1680
      %1682 = vmatmul.f32.gmra.mxu0 %v457
      %v1683 = vpop.f32.mrf.mxu0
      %v1684 = vadd.f32 %v1646, %v1683
      %1685 = vmatmul.f32.gmra.mxu0 %v461
      %v1686 = vpop.f32.mrf.mxu0
      %v1687 = vadd.f32 %v1649, %v1686
      %1688 = vmatmul.f32.gmra.mxu0 %v465
      %v1689 = vpop.f32.mrf.mxu0
      %v1690 = vadd.f32 %v1652, %v1689
      %1691 = vmatmul.f32.gmra.mxu0 %v469
      %v1692 = vpop.f32.mrf.mxu0
      %v1693 = vadd.f32 %v1655, %v1692
      %1694 = vmatmul.f32.gmra.mxu0 %v473
      %v1695 = vpop.f32.mrf.mxu0
      %v1696 = vadd.f32 %v1658, %v1695
      %1697 = vdwg.mxu0
      %1698 = vmatpush.msra.mxu0 %v584
      %1699 = vmatpush.msra.mxu0 %v577
      %1700 = vmatpush.msra.mxu0 %v570
      %1701 = vmatpush.msra.mxu0 %v563
      %1702 = vmatpush.msra.mxu0 %v556
      %1703 = vmatpush.msra.mxu0 %v549
      %1704 = vmatpush.msra.mxu0 %v542
      %1705 = vmatpush.msra.mxu0 %v535
      %1706 = vmatpush.msra.mxu0 %v528
      %1707 = vmatpush.msra.mxu0 %v521
      %1708 = vmatpush.msra.mxu0 %v514
      %1709 = vmatpush.msra.mxu0 %v507
      %1710 = vmatpush.msra.mxu0 %v500
      %1711 = vmatpush.msra.mxu0 %v493
      %1712 = vmatpush.msra.mxu0 %v486
      %1713 = vmatpush.msra.mxu0 %v479
      %1714 = vmatmul.f32.gmra.mxu0 %v446
      %v1715 = vpop.f32.mrf.mxu0
      %v1716 = vadd.f32 %v929, %v1715
      %1717 = vmatmul.f32.gmra.mxu0 %v450
      %v1718 = vpop.f32.mrf.mxu0
      %v1719 = vadd.f32 %v929, %v1718
      %1720 = vmatmul.f32.gmra.mxu0 %v454
      %v1721 = vpop.f32.mrf.mxu0
      %v1722 = vadd.f32 %v929, %v1721
      %1723 = vmatmul.f32.gmra.mxu0 %v458
      %v1724 = vpop.f32.mrf.mxu0
      %v1725 = vadd.f32 %v929, %v1724
      %1726 = vmatmul.f32.gmra.mxu0 %v462
      %v1727 = vpop.f32.mrf.mxu0
      %v1728 = vadd.f32 %v929, %v1727
      %1729 = vmatmul.f32.gmra.mxu0 %v466
      %v1730 = vpop.f32.mrf.mxu0
      %v1731 = vadd.f32 %v929, %v1730
      %1732 = vmatmul.f32.gmra.mxu0 %v470
      %v1733 = vpop.f32.mrf.mxu0
      %v1734 = vadd.f32 %v929, %v1733
      %1735 = vdwg.mxu0
      %1736 = vmatpush.msra.mxu0 %v696
      %1737 = vmatpush.msra.mxu0 %v689
      %1738 = vmatpush.msra.mxu0 %v682
      %1739 = vmatpush.msra.mxu0 %v675
      %1740 = vmatpush.msra.mxu0 %v668
      %1741 = vmatpush.msra.mxu0 %v661
      %1742 = vmatpush.msra.mxu0 %v654
      %1743 = vmatpush.msra.mxu0 %v647
      %1744 = vmatpush.msra.mxu0 %v640
      %1745 = vmatpush.msra.mxu0 %v633
      %1746 = vmatpush.msra.mxu0 %v626
      %1747 = vmatpush.msra.mxu0 %v619
      %1748 = vmatpush.msra.mxu0 %v612
      %1749 = vmatpush.msra.mxu0 %v605
      %1750 = vmatpush.msra.mxu0 %v598
      %1751 = vmatpush.msra.mxu0 %v591
      %1752 = vmatmul.f32.gmra.mxu0 %v447
      %v1753 = vpop.f32.mrf.mxu0
      %v1754 = vadd.f32 %v1716, %v1753
      %1755 = vmatmul.f32.gmra.mxu0 %v451
      %v1756 = vpop.f32.mrf.mxu0
      %v1757 = vadd.f32 %v1719, %v1756
      %1758 = vmatmul.f32.gmra.mxu0 %v455
      %v1759 = vpop.f32.mrf.mxu0
      %v1760 = vadd.f32 %v1722, %v1759
      %1761 = vmatmul.f32.gmra.mxu0 %v459
      %v1762 = vpop.f32.mrf.mxu0
      %v1763 = vadd.f32 %v1725, %v1762
      %1764 = vmatmul.f32.gmra.mxu0 %v463
      %v1765 = vpop.f32.mrf.mxu0
      %v1766 = vadd.f32 %v1728, %v1765
      %1767 = vmatmul.f32.gmra.mxu0 %v467
      %v1768 = vpop.f32.mrf.mxu0
      %v1769 = vadd.f32 %v1731, %v1768
      %1770 = vmatmul.f32.gmra.mxu0 %v471
      %v1771 = vpop.f32.mrf.mxu0
      %v1772 = vadd.f32 %v1734, %v1771
      %1773 = vdwg.mxu0
      %1774 = vmatpush.msra.mxu0 %v808
      %1775 = vmatpush.msra.mxu0 %v801
      %1776 = vmatpush.msra.mxu0 %v794
      %1777 = vmatpush.msra.mxu0 %v787
      %1778 = vmatpush.msra.mxu0 %v780
      %1779 = vmatpush.msra.mxu0 %v773
      %1780 = vmatpush.msra.mxu0 %v766
      %1781 = vmatpush.msra.mxu0 %v759
      %1782 = vmatpush.msra.mxu0 %v752
      %1783 = vmatpush.msra.mxu0 %v745
      %1784 = vmatpush.msra.mxu0 %v738
      %1785 = vmatpush.msra.mxu0 %v731
      %1786 = vmatpush.msra.mxu0 %v724
      %1787 = vmatpush.msra.mxu0 %v717
      %1788 = vmatpush.msra.mxu0 %v710
      %1789 = vmatpush.msra.mxu0 %v703
      %1790 = vmatmul.f32.gmra.mxu0 %v448
      %v1791 = vpop.f32.mrf.mxu0
      %v1792 = vadd.f32 %v1754, %v1791
      %1793 = vmatmul.f32.gmra.mxu0 %v452
      %v1794 = vpop.f32.mrf.mxu0
      %v1795 = vadd.f32 %v1757, %v1794
      %1796 = vmatmul.f32.gmra.mxu0 %v456
      %v1797 = vpop.f32.mrf.mxu0
      %v1798 = vadd.f32 %v1760, %v1797
      %1799 = vmatmul.f32.gmra.mxu0 %v460
      %v1800 = vpop.f32.mrf.mxu0
      %v1801 = vadd.f32 %v1763, %v1800
      %1802 = vmatmul.f32.gmra.mxu0 %v464
      %v1803 = vpop.f32.mrf.mxu0
      %v1804 = vadd.f32 %v1766, %v1803
      %1805 = vmatmul.f32.gmra.mxu0 %v468
      %v1806 = vpop.f32.mrf.mxu0
      %v1807 = vadd.f32 %v1769, %v1806
      %1808 = vmatmul.f32.gmra.mxu0 %v472
      %v1809 = vpop.f32.mrf.mxu0
      %v1810 = vadd.f32 %v1772, %v1809
      %1811 = vdwg.mxu0
      %1812 = vmatpush.msra.mxu0 %v920
      %1813 = vmatpush.msra.mxu0 %v913
      %1814 = vmatpush.msra.mxu0 %v906
      %1815 = vmatpush.msra.mxu0 %v899
      %1816 = vmatpush.msra.mxu0 %v892
      %1817 = vmatpush.msra.mxu0 %v885
      %1818 = vmatpush.msra.mxu0 %v878
      %1819 = vmatpush.msra.mxu0 %v871
      %1820 = vmatpush.msra.mxu0 %v864
      %1821 = vmatpush.msra.mxu0 %v857
      %1822 = vmatpush.msra.mxu0 %v850
      %1823 = vmatpush.msra.mxu0 %v843
      %1824 = vmatpush.msra.mxu0 %v836
      %1825 = vmatpush.msra.mxu0 %v829
      %1826 = vmatpush.msra.mxu0 %v822
      %1827 = vmatpush.msra.mxu0 %v815
      %1828 = vmatmul.f32.gmra.mxu0 %v449
      %v1829 = vpop.f32.mrf.mxu0
      %v1830 = vadd.f32 %v1792, %v1829
      %1831 = vmatmul.f32.gmra.mxu0 %v453
      %v1832 = vpop.f32.mrf.mxu0
      %v1833 = vadd.f32 %v1795, %v1832
      %1834 = vmatmul.f32.gmra.mxu0 %v457
      %v1835 = vpop.f32.mrf.mxu0
      %v1836 = vadd.f32 %v1798, %v1835
      %1837 = vmatmul.f32.gmra.mxu0 %v461
      %v1838 = vpop.f32.mrf.mxu0
      %v1839 = vadd.f32 %v1801, %v1838
      %1840 = vmatmul.f32.gmra.mxu0 %v465
      %v1841 = vpop.f32.mrf.mxu0
      %v1842 = vadd.f32 %v1804, %v1841
      %1843 = vmatmul.f32.gmra.mxu0 %v469
      %v1844 = vpop.f32.mrf.mxu0
      %v1845 = vadd.f32 %v1807, %v1844
      %1846 = vmatmul.f32.gmra.mxu0 %v473
      %v1847 = vpop.f32.mrf.mxu0
      %v1848 = vadd.f32 %v1810, %v1847
      %1849 = vdwg.mxu0
      %1850 = vmatpush.msra.mxu0 %v585
      %1851 = vmatpush.msra.mxu0 %v578
      %1852 = vmatpush.msra.mxu0 %v571
      %1853 = vmatpush.msra.mxu0 %v564
      %1854 = vmatpush.msra.mxu0 %v557
      %1855 = vmatpush.msra.mxu0 %v550
      %1856 = vmatpush.msra.mxu0 %v543
      %1857 = vmatpush.msra.mxu0 %v536
      %1858 = vmatpush.msra.mxu0 %v529
      %1859 = vmatpush.msra.mxu0 %v522
      %1860 = vmatpush.msra.mxu0 %v515
      %1861 = vmatpush.msra.mxu0 %v508
      %1862 = vmatpush.msra.mxu0 %v501
      %1863 = vmatpush.msra.mxu0 %v494
      %1864 = vmatpush.msra.mxu0 %v487
      %1865 = vmatpush.msra.mxu0 %v480
      %1866 = vmatmul.f32.gmra.mxu0 %v446
      %v1867 = vpop.f32.mrf.mxu0
      %v1868 = vadd.f32 %v930, %v1867
      %1869 = vmatmul.f32.gmra.mxu0 %v450
      %v1870 = vpop.f32.mrf.mxu0
      %v1871 = vadd.f32 %v930, %v1870
      %1872 = vmatmul.f32.gmra.mxu0 %v454
      %v1873 = vpop.f32.mrf.mxu0
      %v1874 = vadd.f32 %v930, %v1873
      %1875 = vmatmul.f32.gmra.mxu0 %v458
      %v1876 = vpop.f32.mrf.mxu0
      %v1877 = vadd.f32 %v930, %v1876
      %1878 = vmatmul.f32.gmra.mxu0 %v462
      %v1879 = vpop.f32.mrf.mxu0
      %v1880 = vadd.f32 %v930, %v1879
      %1881 = vmatmul.f32.gmra.mxu0 %v466
      %v1882 = vpop.f32.mrf.mxu0
      %v1883 = vadd.f32 %v930, %v1882
      %1884 = vmatmul.f32.gmra.mxu0 %v470
      %v1885 = vpop.f32.mrf.mxu0
      %v1886 = vadd.f32 %v930, %v1885
      %1887 = vdwg.mxu0
      %1888 = vmatpush.msra.mxu0 %v697
      %1889 = vmatpush.msra.mxu0 %v690
      %1890 = vmatpush.msra.mxu0 %v683
      %1891 = vmatpush.msra.mxu0 %v676
      %1892 = vmatpush.msra.mxu0 %v669
      %1893 = vmatpush.msra.mxu0 %v662
      %1894 = vmatpush.msra.mxu0 %v655
      %1895 = vmatpush.msra.mxu0 %v648
      %1896 = vmatpush.msra.mxu0 %v641
      %1897 = vmatpush.msra.mxu0 %v634
      %1898 = vmatpush.msra.mxu0 %v627
      %1899 = vmatpush.msra.mxu0 %v620
      %1900 = vmatpush.msra.mxu0 %v613
      %1901 = vmatpush.msra.mxu0 %v606
      %1902 = vmatpush.msra.mxu0 %v599
      %1903 = vmatpush.msra.mxu0 %v592
      %1904 = vmatmul.f32.gmra.mxu0 %v447
      %v1905 = vpop.f32.mrf.mxu0
      %v1906 = vadd.f32 %v1868, %v1905
      %1907 = vmatmul.f32.gmra.mxu0 %v451
      %v1908 = vpop.f32.mrf.mxu0
      %v1909 = vadd.f32 %v1871, %v1908
      %1910 = vmatmul.f32.gmra.mxu0 %v455
      %v1911 = vpop.f32.mrf.mxu0
      %v1912 = vadd.f32 %v1874, %v1911
      %1913 = vmatmul.f32.gmra.mxu0 %v459
      %v1914 = vpop.f32.mrf.mxu0
      %v1915 = vadd.f32 %v1877, %v1914
      %1916 = vmatmul.f32.gmra.mxu0 %v463
      %v1917 = vpop.f32.mrf.mxu0
      %v1918 = vadd.f32 %v1880, %v1917
      %1919 = vmatmul.f32.gmra.mxu0 %v467
      %v1920 = vpop.f32.mrf.mxu0
      %v1921 = vadd.f32 %v1883, %v1920
      %1922 = vmatmul.f32.gmra.mxu0 %v471
      %v1923 = vpop.f32.mrf.mxu0
      %v1924 = vadd.f32 %v1886, %v1923
      %1925 = vdwg.mxu0
      %1926 = vmatpush.msra.mxu0 %v809
      %1927 = vmatpush.msra.mxu0 %v802
      %1928 = vmatpush.msra.mxu0 %v795
      %1929 = vmatpush.msra.mxu0 %v788
      %1930 = vmatpush.msra.mxu0 %v781
      %1931 = vmatpush.msra.mxu0 %v774
      %1932 = vmatpush.msra.mxu0 %v767
      %1933 = vmatpush.msra.mxu0 %v760
      %1934 = vmatpush.msra.mxu0 %v753
      %1935 = vmatpush.msra.mxu0 %v746
      %1936 = vmatpush.msra.mxu0 %v739
      %1937 = vmatpush.msra.mxu0 %v732
      %1938 = vmatpush.msra.mxu0 %v725
      %1939 = vmatpush.msra.mxu0 %v718
      %1940 = vmatpush.msra.mxu0 %v711
      %1941 = vmatpush.msra.mxu0 %v704
      %1942 = vmatmul.f32.gmra.mxu0 %v448
      %v1943 = vpop.f32.mrf.mxu0
      %v1944 = vadd.f32 %v1906, %v1943
      %1945 = vmatmul.f32.gmra.mxu0 %v452
      %v1946 = vpop.f32.mrf.mxu0
      %v1947 = vadd.f32 %v1909, %v1946
      %1948 = vmatmul.f32.gmra.mxu0 %v456
      %v1949 = vpop.f32.mrf.mxu0
      %v1950 = vadd.f32 %v1912, %v1949
      %1951 = vmatmul.f32.gmra.mxu0 %v460
      %v1952 = vpop.f32.mrf.mxu0
      %v1953 = vadd.f32 %v1915, %v1952
      %1954 = vmatmul.f32.gmra.mxu0 %v464
      %v1955 = vpop.f32.mrf.mxu0
      %v1956 = vadd.f32 %v1918, %v1955
      %1957 = vmatmul.f32.gmra.mxu0 %v468
      %v1958 = vpop.f32.mrf.mxu0
      %v1959 = vadd.f32 %v1921, %v1958
      %1960 = vmatmul.f32.gmra.mxu0 %v472
      %v1961 = vpop.f32.mrf.mxu0
      %v1962 = vadd.f32 %v1924, %v1961
      %1963 = vdwg.mxu0
      %1964 = vmatpush.msra.mxu0 %v921
      %1965 = vmatpush.msra.mxu0 %v914
      %1966 = vmatpush.msra.mxu0 %v907
      %1967 = vmatpush.msra.mxu0 %v900
      %1968 = vmatpush.msra.mxu0 %v893
      %1969 = vmatpush.msra.mxu0 %v886
      %1970 = vmatpush.msra.mxu0 %v879
      %1971 = vmatpush.msra.mxu0 %v872
      %1972 = vmatpush.msra.mxu0 %v865
      %1973 = vmatpush.msra.mxu0 %v858
      %1974 = vmatpush.msra.mxu0 %v851
      %1975 = vmatpush.msra.mxu0 %v844
      %1976 = vmatpush.msra.mxu0 %v837
      %1977 = vmatpush.msra.mxu0 %v830
      %1978 = vmatpush.msra.mxu0 %v823
      %1979 = vmatpush.msra.mxu0 %v816
      %1980 = vmatmul.f32.gmra.mxu0 %v449
      %v1981 = vpop.f32.mrf.mxu0
      %v1982 = vadd.f32 %v1944, %v1981
      %1983 = vmatmul.f32.gmra.mxu0 %v453
      %v1984 = vpop.f32.mrf.mxu0
      %v1985 = vadd.f32 %v1947, %v1984
      %1986 = vmatmul.f32.gmra.mxu0 %v457
      %v1987 = vpop.f32.mrf.mxu0
      %v1988 = vadd.f32 %v1950, %v1987
      %1989 = vmatmul.f32.gmra.mxu0 %v461
      %v1990 = vpop.f32.mrf.mxu0
      %v1991 = vadd.f32 %v1953, %v1990
      %1992 = vmatmul.f32.gmra.mxu0 %v465
      %v1993 = vpop.f32.mrf.mxu0
      %v1994 = vadd.f32 %v1956, %v1993
      %1995 = vmatmul.f32.gmra.mxu0 %v469
      %v1996 = vpop.f32.mrf.mxu0
      %v1997 = vadd.f32 %v1959, %v1996
      %1998 = vmatmul.f32.gmra.mxu0 %v473
      %v1999 = vpop.f32.mrf.mxu0
      %v2000 = vadd.f32 %v1962, %v1999
      %2001 = vdwg.mxu0
      %v2002 = vxor.u32 %v1070, 2147483648
      %v2003 = vxor.u32 %v1222, 2147483648
      %v2004 = vxor.u32 %v1374, 2147483648
      %v2005 = vxor.u32 %v1526, 2147483648
      %v2006 = vxor.u32 %v1678, 2147483648
      %v2007 = vxor.u32 %v1830, 2147483648
      %v2008 = vxor.u32 %v1982, 2147483648
      %v2009 = vxor.u32 %v1073, 2147483648
      %v2010 = vxor.u32 %v1225, 2147483648
      %v2011 = vxor.u32 %v1377, 2147483648
      %v2012 = vxor.u32 %v1529, 2147483648
      %v2013 = vxor.u32 %v1681, 2147483648
      %v2014 = vxor.u32 %v1833, 2147483648
      %v2015 = vxor.u32 %v1985, 2147483648
      %v2016 = vxor.u32 %v1076, 2147483648
      %v2017 = vxor.u32 %v1228, 2147483648
      %v2018 = vxor.u32 %v1380, 2147483648
      %v2019 = vxor.u32 %v1532, 2147483648
      %v2020 = vxor.u32 %v1684, 2147483648
      %v2021 = vxor.u32 %v1836, 2147483648
      %v2022 = vxor.u32 %v1988, 2147483648
      %v2023 = vxor.u32 %v1079, 2147483648
      %v2024 = vxor.u32 %v1231, 2147483648
      %v2025 = vxor.u32 %v1383, 2147483648
      %v2026 = vxor.u32 %v1535, 2147483648
      %v2027 = vxor.u32 %v1687, 2147483648
      %v2028 = vxor.u32 %v1839, 2147483648
      %v2029 = vxor.u32 %v1991, 2147483648
      %v2030 = vxor.u32 %v1082, 2147483648
      %v2031 = vxor.u32 %v1234, 2147483648
      %v2032 = vxor.u32 %v1386, 2147483648
      %v2033 = vxor.u32 %v1538, 2147483648
      %v2034 = vxor.u32 %v1690, 2147483648
      %v2035 = vxor.u32 %v1842, 2147483648
      %v2036 = vxor.u32 %v1994, 2147483648
      %v2037 = vxor.u32 %v1085, 2147483648
      %v2038 = vxor.u32 %v1237, 2147483648
      %v2039 = vxor.u32 %v1389, 2147483648
      %v2040 = vxor.u32 %v1541, 2147483648
      %v2041 = vxor.u32 %v1693, 2147483648
      %v2042 = vxor.u32 %v1845, 2147483648
      %v2043 = vxor.u32 %v1997, 2147483648
      %v2044 = vxor.u32 %v1088, 2147483648
      %v2045 = vxor.u32 %v1240, 2147483648
      %v2046 = vxor.u32 %v1392, 2147483648
      %v2047 = vxor.u32 %v1544, 2147483648
      %v2048 = vxor.u32 %v1696, 2147483648
      %v2049 = vxor.u32 %v1848, 2147483648
      %v2050 = vxor.u32 %v2000, 2147483648
      %v2051 = vmul.f32 %v2002, 1.442695
      %v2052 = vpow.pop %v2051
      %v2053 = vmul.f32 %v2003, 1.442695
      %v2054 = vpow.pop %v2053
      %v2055 = vmul.f32 %v2004, 1.442695
      %v2056 = vpow.pop %v2055
      %v2057 = vmul.f32 %v2005, 1.442695
      %v2058 = vpow.pop %v2057
      %v2059 = vmul.f32 %v2006, 1.442695
      %v2060 = vpow.pop %v2059
      %v2061 = vmul.f32 %v2007, 1.442695
      %v2062 = vpow.pop %v2061
      %v2063 = vmul.f32 %v2008, 1.442695
      %v2064 = vpow.pop %v2063
      %v2065 = vmul.f32 %v2009, 1.442695
      %v2066 = vpow.pop %v2065
      %v2067 = vmul.f32 %v2010, 1.442695
      %v2068 = vpow.pop %v2067
      %v2069 = vmul.f32 %v2011, 1.442695
      %v2070 = vpow.pop %v2069
      %v2071 = vmul.f32 %v2012, 1.442695
      %v2072 = vpow.pop %v2071
      %v2073 = vmul.f32 %v2013, 1.442695
      %v2074 = vpow.pop %v2073
      %v2075 = vmul.f32 %v2014, 1.442695
      %v2076 = vpow.pop %v2075
      %v2077 = vmul.f32 %v2015, 1.442695
      %v2078 = vpow.pop %v2077
      %v2079 = vmul.f32 %v2016, 1.442695
      %v2080 = vpow.pop %v2079
      %v2081 = vmul.f32 %v2017, 1.442695
      %v2082 = vpow.pop %v2081
      %v2083 = vmul.f32 %v2018, 1.442695
      %v2084 = vpow.pop %v2083
      %v2085 = vmul.f32 %v2019, 1.442695
      %v2086 = vpow.pop %v2085
      %v2087 = vmul.f32 %v2020, 1.442695
      %v2088 = vpow.pop %v2087
      %v2089 = vmul.f32 %v2021, 1.442695
      %v2090 = vpow.pop %v2089
      %v2091 = vmul.f32 %v2022, 1.442695
      %v2092 = vpow.pop %v2091
      %v2093 = vmul.f32 %v2023, 1.442695
      %v2094 = vpow.pop %v2093
      %v2095 = vmul.f32 %v2024, 1.442695
      %v2096 = vpow.pop %v2095
      %v2097 = vmul.f32 %v2025, 1.442695
      %v2098 = vpow.pop %v2097
      %v2099 = vmul.f32 %v2026, 1.442695
      %v2100 = vpow.pop %v2099
      %v2101 = vmul.f32 %v2027, 1.442695
      %v2102 = vpow.pop %v2101
      %v2103 = vmul.f32 %v2028, 1.442695
      %v2104 = vpow.pop %v2103
      %v2105 = vmul.f32 %v2029, 1.442695
      %v2106 = vpow.pop %v2105
      %v2107 = vmul.f32 %v2030, 1.442695
      %v2108 = vpow.pop %v2107
      %v2109 = vmul.f32 %v2031, 1.442695
      %v2110 = vpow.pop %v2109
      %v2111 = vmul.f32 %v2032, 1.442695
      %v2112 = vpow.pop %v2111
      %v2113 = vmul.f32 %v2033, 1.442695
      %v2114 = vpow.pop %v2113
      %v2115 = vmul.f32 %v2034, 1.442695
      %v2116 = vpow.pop %v2115
      %v2117 = vmul.f32 %v2035, 1.442695
      %v2118 = vpow.pop %v2117
      %v2119 = vmul.f32 %v2036, 1.442695
      %v2120 = vpow.pop %v2119
      %v2121 = vmul.f32 %v2037, 1.442695
      %v2122 = vpow.pop %v2121
      %v2123 = vmul.f32 %v2038, 1.442695
      %v2124 = vpow.pop %v2123
      %v2125 = vmul.f32 %v2039, 1.442695
      %v2126 = vpow.pop %v2125
      %v2127 = vmul.f32 %v2040, 1.442695
      %v2128 = vpow.pop %v2127
      %v2129 = vmul.f32 %v2041, 1.442695
      %v2130 = vpow.pop %v2129
      %v2131 = vmul.f32 %v2042, 1.442695
      %v2132 = vpow.pop %v2131
      %v2133 = vmul.f32 %v2043, 1.442695
      %v2134 = vpow.pop %v2133
      %v2135 = vmul.f32 %v2044, 1.442695
      %v2136 = vpow.pop %v2135
      %v2137 = vmul.f32 %v2045, 1.442695
      %v2138 = vpow.pop %v2137
      %v2139 = vmul.f32 %v2046, 1.442695
      %v2140 = vpow.pop %v2139
      %v2141 = vmul.f32 %v2047, 1.442695
      %v2142 = vpow.pop %v2141
      %v2143 = vmul.f32 %v2048, 1.442695
      %v2144 = vpow.pop %v2143
      %v2145 = vmul.f32 %v2049, 1.442695
      %v2146 = vpow.pop %v2145
      %v2147 = vmul.f32 %v2050, 1.442695
      %v2148 = vpow.pop %v2147
      %v2149 = vadd.f32 %v2052, 1.0
      %v2150 = vadd.f32 %v2054, 1.0
      %v2151 = vadd.f32 %v2056, 1.0
      %v2152 = vadd.f32 %v2058, 1.0
      %v2153 = vadd.f32 %v2060, 1.0
      %v2154 = vadd.f32 %v2062, 1.0
      %v2155 = vadd.f32 %v2064, 1.0
      %v2156 = vadd.f32 %v2066, 1.0
      %v2157 = vadd.f32 %v2068, 1.0
      %v2158 = vadd.f32 %v2070, 1.0
      %v2159 = vadd.f32 %v2072, 1.0
      %v2160 = vadd.f32 %v2074, 1.0
      %v2161 = vadd.f32 %v2076, 1.0
      %v2162 = vadd.f32 %v2078, 1.0
      %v2163 = vadd.f32 %v2080, 1.0
      %v2164 = vadd.f32 %v2082, 1.0
      %v2165 = vadd.f32 %v2084, 1.0
      %v2166 = vadd.f32 %v2086, 1.0
      %v2167 = vadd.f32 %v2088, 1.0
      %v2168 = vadd.f32 %v2090, 1.0
      %v2169 = vadd.f32 %v2092, 1.0
      %v2170 = vadd.f32 %v2094, 1.0
      %v2171 = vadd.f32 %v2096, 1.0
      %v2172 = vadd.f32 %v2098, 1.0
      %v2173 = vadd.f32 %v2100, 1.0
      %v2174 = vadd.f32 %v2102, 1.0
      %v2175 = vadd.f32 %v2104, 1.0
      %v2176 = vadd.f32 %v2106, 1.0
      %v2177 = vadd.f32 %v2108, 1.0
      %v2178 = vadd.f32 %v2110, 1.0
      %v2179 = vadd.f32 %v2112, 1.0
      %v2180 = vadd.f32 %v2114, 1.0
      %v2181 = vadd.f32 %v2116, 1.0
      %v2182 = vadd.f32 %v2118, 1.0
      %v2183 = vadd.f32 %v2120, 1.0
      %v2184 = vadd.f32 %v2122, 1.0
      %v2185 = vadd.f32 %v2124, 1.0
      %v2186 = vadd.f32 %v2126, 1.0
      %v2187 = vadd.f32 %v2128, 1.0
      %v2188 = vadd.f32 %v2130, 1.0
      %v2189 = vadd.f32 %v2132, 1.0
      %v2190 = vadd.f32 %v2134, 1.0
      %v2191 = vadd.f32 %v2136, 1.0
      %v2192 = vadd.f32 %v2138, 1.0
      %v2193 = vadd.f32 %v2140, 1.0
      %v2194 = vadd.f32 %v2142, 1.0
      %v2195 = vadd.f32 %v2144, 1.0
      %v2196 = vadd.f32 %v2146, 1.0
      %v2197 = vadd.f32 %v2148, 1.0
      %v2198 = vrcp.pop %v2149
      %v2199 = vmul.f32 %v2149, %v2198
      %v2200 = vsub.f32 1.0, %v2199
      %v2201 = vmul.f32 %v2198, %v2200
      %v2202 = vadd.f32 %v2198, %v2201
      %vm2203 = vweird.f32 %v2149
      %vm2204 = vweird.f32 %v2198
      %vm2205 = vmor %vm2203, %vm2204
      %v2206 = vsel %vm2205, %v2198, %v2202
      %v2207 = vand.u32 2147483647, %v2149
      %vm2208 = vcmp.eq.f32.partialorder %v2207, 8.507059e+37
      %v2209 = vand.u32 %v2149, 2147483648
      %v2210 = vor.u32 1.1754944e-38, %v2209
      %v2211 = vsel %vm2208, %v2210, %v2206
      %v2212 = vmul.f32 1.0, %v2211
      %v2213 = vrcp.pop %v2150
      %v2214 = vmul.f32 %v2150, %v2213
      %v2215 = vsub.f32 1.0, %v2214
      %v2216 = vmul.f32 %v2213, %v2215
      %v2217 = vadd.f32 %v2213, %v2216
      %vm2218 = vweird.f32 %v2150
      %vm2219 = vweird.f32 %v2213
      %vm2220 = vmor %vm2218, %vm2219
      %v2221 = vsel %vm2220, %v2213, %v2217
      %v2222 = vand.u32 2147483647, %v2150
      %vm2223 = vcmp.eq.f32.partialorder %v2222, 8.507059e+37
      %v2224 = vand.u32 %v2150, 2147483648
      %v2225 = vor.u32 1.1754944e-38, %v2224
      %v2226 = vsel %vm2223, %v2225, %v2221
      %v2227 = vmul.f32 1.0, %v2226
      %v2228 = vrcp.pop %v2151
      %v2229 = vmul.f32 %v2151, %v2228
      %v2230 = vsub.f32 1.0, %v2229
      %v2231 = vmul.f32 %v2228, %v2230
      %v2232 = vadd.f32 %v2228, %v2231
      %vm2233 = vweird.f32 %v2151
      %vm2234 = vweird.f32 %v2228
      %vm2235 = vmor %vm2233, %vm2234
      %v2236 = vsel %vm2235, %v2228, %v2232
      %v2237 = vand.u32 2147483647, %v2151
      %vm2238 = vcmp.eq.f32.partialorder %v2237, 8.507059e+37
      %v2239 = vand.u32 %v2151, 2147483648
      %v2240 = vor.u32 1.1754944e-38, %v2239
      %v2241 = vsel %vm2238, %v2240, %v2236
      %v2242 = vmul.f32 1.0, %v2241
      %v2243 = vrcp.pop %v2152
      %v2244 = vmul.f32 %v2152, %v2243
      %v2245 = vsub.f32 1.0, %v2244
      %v2246 = vmul.f32 %v2243, %v2245
      %v2247 = vadd.f32 %v2243, %v2246
      %vm2248 = vweird.f32 %v2152
      %vm2249 = vweird.f32 %v2243
      %vm2250 = vmor %vm2248, %vm2249
      %v2251 = vsel %vm2250, %v2243, %v2247
      %v2252 = vand.u32 2147483647, %v2152
      %vm2253 = vcmp.eq.f32.partialorder %v2252, 8.507059e+37
      %v2254 = vand.u32 %v2152, 2147483648
      %v2255 = vor.u32 1.1754944e-38, %v2254
      %v2256 = vsel %vm2253, %v2255, %v2251
      %v2257 = vmul.f32 1.0, %v2256
      %v2258 = vrcp.pop %v2153
      %v2259 = vmul.f32 %v2153, %v2258
      %v2260 = vsub.f32 1.0, %v2259
      %v2261 = vmul.f32 %v2258, %v2260
      %v2262 = vadd.f32 %v2258, %v2261
      %vm2263 = vweird.f32 %v2153
      %vm2264 = vweird.f32 %v2258
      %vm2265 = vmor %vm2263, %vm2264
      %v2266 = vsel %vm2265, %v2258, %v2262
      %v2267 = vand.u32 2147483647, %v2153
      %vm2268 = vcmp.eq.f32.partialorder %v2267, 8.507059e+37
      %v2269 = vand.u32 %v2153, 2147483648
      %v2270 = vor.u32 1.1754944e-38, %v2269
      %v2271 = vsel %vm2268, %v2270, %v2266
      %v2272 = vmul.f32 1.0, %v2271
      %v2273 = vrcp.pop %v2154
      %v2274 = vmul.f32 %v2154, %v2273
      %v2275 = vsub.f32 1.0, %v2274
      %v2276 = vmul.f32 %v2273, %v2275
      %v2277 = vadd.f32 %v2273, %v2276
      %vm2278 = vweird.f32 %v2154
      %vm2279 = vweird.f32 %v2273
      %vm2280 = vmor %vm2278, %vm2279
      %v2281 = vsel %vm2280, %v2273, %v2277
      %v2282 = vand.u32 2147483647, %v2154
      %vm2283 = vcmp.eq.f32.partialorder %v2282, 8.507059e+37
      %v2284 = vand.u32 %v2154, 2147483648
      %v2285 = vor.u32 1.1754944e-38, %v2284
      %v2286 = vsel %vm2283, %v2285, %v2281
      %v2287 = vmul.f32 1.0, %v2286
      %v2288 = vrcp.pop %v2155
      %v2289 = vmul.f32 %v2155, %v2288
      %v2290 = vsub.f32 1.0, %v2289
      %v2291 = vmul.f32 %v2288, %v2290
      %v2292 = vadd.f32 %v2288, %v2291
      %vm2293 = vweird.f32 %v2155
      %vm2294 = vweird.f32 %v2288
      %vm2295 = vmor %vm2293, %vm2294
      %v2296 = vsel %vm2295, %v2288, %v2292
      %v2297 = vand.u32 2147483647, %v2155
      %vm2298 = vcmp.eq.f32.partialorder %v2297, 8.507059e+37
      %v2299 = vand.u32 %v2155, 2147483648
      %v2300 = vor.u32 1.1754944e-38, %v2299
      %v2301 = vsel %vm2298, %v2300, %v2296
      %v2302 = vmul.f32 1.0, %v2301
      %v2303 = vrcp.pop %v2156
      %v2304 = vmul.f32 %v2156, %v2303
      %v2305 = vsub.f32 1.0, %v2304
      %v2306 = vmul.f32 %v2303, %v2305
      %v2307 = vadd.f32 %v2303, %v2306
      %vm2308 = vweird.f32 %v2156
      %vm2309 = vweird.f32 %v2303
      %vm2310 = vmor %vm2308, %vm2309
      %v2311 = vsel %vm2310, %v2303, %v2307
      %v2312 = vand.u32 2147483647, %v2156
      %vm2313 = vcmp.eq.f32.partialorder %v2312, 8.507059e+37
      %v2314 = vand.u32 %v2156, 2147483648
      %v2315 = vor.u32 1.1754944e-38, %v2314
      %v2316 = vsel %vm2313, %v2315, %v2311
      %v2317 = vmul.f32 1.0, %v2316
      %v2318 = vrcp.pop %v2157
      %v2319 = vmul.f32 %v2157, %v2318
      %v2320 = vsub.f32 1.0, %v2319
      %v2321 = vmul.f32 %v2318, %v2320
      %v2322 = vadd.f32 %v2318, %v2321
      %vm2323 = vweird.f32 %v2157
      %vm2324 = vweird.f32 %v2318
      %vm2325 = vmor %vm2323, %vm2324
      %v2326 = vsel %vm2325, %v2318, %v2322
      %v2327 = vand.u32 2147483647, %v2157
      %vm2328 = vcmp.eq.f32.partialorder %v2327, 8.507059e+37
      %v2329 = vand.u32 %v2157, 2147483648
      %v2330 = vor.u32 1.1754944e-38, %v2329
      %v2331 = vsel %vm2328, %v2330, %v2326
      %v2332 = vmul.f32 1.0, %v2331
      %v2333 = vrcp.pop %v2158
      %v2334 = vmul.f32 %v2158, %v2333
      %v2335 = vsub.f32 1.0, %v2334
      %v2336 = vmul.f32 %v2333, %v2335
      %v2337 = vadd.f32 %v2333, %v2336
      %vm2338 = vweird.f32 %v2158
      %vm2339 = vweird.f32 %v2333
      %vm2340 = vmor %vm2338, %vm2339
      %v2341 = vsel %vm2340, %v2333, %v2337
      %v2342 = vand.u32 2147483647, %v2158
      %vm2343 = vcmp.eq.f32.partialorder %v2342, 8.507059e+37
      %v2344 = vand.u32 %v2158, 2147483648
      %v2345 = vor.u32 1.1754944e-38, %v2344
      %v2346 = vsel %vm2343, %v2345, %v2341
      %v2347 = vmul.f32 1.0, %v2346
      %v2348 = vrcp.pop %v2159
      %v2349 = vmul.f32 %v2159, %v2348
      %v2350 = vsub.f32 1.0, %v2349
      %v2351 = vmul.f32 %v2348, %v2350
      %v2352 = vadd.f32 %v2348, %v2351
      %vm2353 = vweird.f32 %v2159
      %vm2354 = vweird.f32 %v2348
      %vm2355 = vmor %vm2353, %vm2354
      %v2356 = vsel %vm2355, %v2348, %v2352
      %v2357 = vand.u32 2147483647, %v2159
      %vm2358 = vcmp.eq.f32.partialorder %v2357, 8.507059e+37
      %v2359 = vand.u32 %v2159, 2147483648
      %v2360 = vor.u32 1.1754944e-38, %v2359
      %v2361 = vsel %vm2358, %v2360, %v2356
      %v2362 = vmul.f32 1.0, %v2361
      %v2363 = vrcp.pop %v2160
      %v2364 = vmul.f32 %v2160, %v2363
      %v2365 = vsub.f32 1.0, %v2364
      %v2366 = vmul.f32 %v2363, %v2365
      %v2367 = vadd.f32 %v2363, %v2366
      %vm2368 = vweird.f32 %v2160
      %vm2369 = vweird.f32 %v2363
      %vm2370 = vmor %vm2368, %vm2369
      %v2371 = vsel %vm2370, %v2363, %v2367
      %v2372 = vand.u32 2147483647, %v2160
      %vm2373 = vcmp.eq.f32.partialorder %v2372, 8.507059e+37
      %v2374 = vand.u32 %v2160, 2147483648
      %v2375 = vor.u32 1.1754944e-38, %v2374
      %v2376 = vsel %vm2373, %v2375, %v2371
      %v2377 = vmul.f32 1.0, %v2376
      %v2378 = vrcp.pop %v2161
      %v2379 = vmul.f32 %v2161, %v2378
      %v2380 = vsub.f32 1.0, %v2379
      %v2381 = vmul.f32 %v2378, %v2380
      %v2382 = vadd.f32 %v2378, %v2381
      %vm2383 = vweird.f32 %v2161
      %vm2384 = vweird.f32 %v2378
      %vm2385 = vmor %vm2383, %vm2384
      %v2386 = vsel %vm2385, %v2378, %v2382
      %v2387 = vand.u32 2147483647, %v2161
      %vm2388 = vcmp.eq.f32.partialorder %v2387, 8.507059e+37
      %v2389 = vand.u32 %v2161, 2147483648
      %v2390 = vor.u32 1.1754944e-38, %v2389
      %v2391 = vsel %vm2388, %v2390, %v2386
      %v2392 = vmul.f32 1.0, %v2391
      %v2393 = vrcp.pop %v2162
      %v2394 = vmul.f32 %v2162, %v2393
      %v2395 = vsub.f32 1.0, %v2394
      %v2396 = vmul.f32 %v2393, %v2395
      %v2397 = vadd.f32 %v2393, %v2396
      %vm2398 = vweird.f32 %v2162
      %vm2399 = vweird.f32 %v2393
      %vm2400 = vmor %vm2398, %vm2399
      %v2401 = vsel %vm2400, %v2393, %v2397
      %v2402 = vand.u32 2147483647, %v2162
      %vm2403 = vcmp.eq.f32.partialorder %v2402, 8.507059e+37
      %v2404 = vand.u32 %v2162, 2147483648
      %v2405 = vor.u32 1.1754944e-38, %v2404
      %v2406 = vsel %vm2403, %v2405, %v2401
      %v2407 = vmul.f32 1.0, %v2406
      %v2408 = vrcp.pop %v2163
      %v2409 = vmul.f32 %v2163, %v2408
      %v2410 = vsub.f32 1.0, %v2409
      %v2411 = vmul.f32 %v2408, %v2410
      %v2412 = vadd.f32 %v2408, %v2411
      %vm2413 = vweird.f32 %v2163
      %vm2414 = vweird.f32 %v2408
      %vm2415 = vmor %vm2413, %vm2414
      %v2416 = vsel %vm2415, %v2408, %v2412
      %v2417 = vand.u32 2147483647, %v2163
      %vm2418 = vcmp.eq.f32.partialorder %v2417, 8.507059e+37
      %v2419 = vand.u32 %v2163, 2147483648
      %v2420 = vor.u32 1.1754944e-38, %v2419
      %v2421 = vsel %vm2418, %v2420, %v2416
      %v2422 = vmul.f32 1.0, %v2421
      %v2423 = vrcp.pop %v2164
      %v2424 = vmul.f32 %v2164, %v2423
      %v2425 = vsub.f32 1.0, %v2424
      %v2426 = vmul.f32 %v2423, %v2425
      %v2427 = vadd.f32 %v2423, %v2426
      %vm2428 = vweird.f32 %v2164
      %vm2429 = vweird.f32 %v2423
      %vm2430 = vmor %vm2428, %vm2429
      %v2431 = vsel %vm2430, %v2423, %v2427
      %v2432 = vand.u32 2147483647, %v2164
      %vm2433 = vcmp.eq.f32.partialorder %v2432, 8.507059e+37
      %v2434 = vand.u32 %v2164, 2147483648
      %v2435 = vor.u32 1.1754944e-38, %v2434
      %v2436 = vsel %vm2433, %v2435, %v2431
      %v2437 = vmul.f32 1.0, %v2436
      %v2438 = vrcp.pop %v2165
      %v2439 = vmul.f32 %v2165, %v2438
      %v2440 = vsub.f32 1.0, %v2439
      %v2441 = vmul.f32 %v2438, %v2440
      %v2442 = vadd.f32 %v2438, %v2441
      %vm2443 = vweird.f32 %v2165
      %vm2444 = vweird.f32 %v2438
      %vm2445 = vmor %vm2443, %vm2444
      %v2446 = vsel %vm2445, %v2438, %v2442
      %v2447 = vand.u32 2147483647, %v2165
      %vm2448 = vcmp.eq.f32.partialorder %v2447, 8.507059e+37
      %v2449 = vand.u32 %v2165, 2147483648
      %v2450 = vor.u32 1.1754944e-38, %v2449
      %v2451 = vsel %vm2448, %v2450, %v2446
      %v2452 = vmul.f32 1.0, %v2451
      %v2453 = vrcp.pop %v2166
      %v2454 = vmul.f32 %v2166, %v2453
      %v2455 = vsub.f32 1.0, %v2454
      %v2456 = vmul.f32 %v2453, %v2455
      %v2457 = vadd.f32 %v2453, %v2456
      %vm2458 = vweird.f32 %v2166
      %vm2459 = vweird.f32 %v2453
      %vm2460 = vmor %vm2458, %vm2459
      %v2461 = vsel %vm2460, %v2453, %v2457
      %v2462 = vand.u32 2147483647, %v2166
      %vm2463 = vcmp.eq.f32.partialorder %v2462, 8.507059e+37
      %v2464 = vand.u32 %v2166, 2147483648
      %v2465 = vor.u32 1.1754944e-38, %v2464
      %v2466 = vsel %vm2463, %v2465, %v2461
      %v2467 = vmul.f32 1.0, %v2466
      %v2468 = vrcp.pop %v2167
      %v2469 = vmul.f32 %v2167, %v2468
      %v2470 = vsub.f32 1.0, %v2469
      %v2471 = vmul.f32 %v2468, %v2470
      %v2472 = vadd.f32 %v2468, %v2471
      %vm2473 = vweird.f32 %v2167
      %vm2474 = vweird.f32 %v2468
      %vm2475 = vmor %vm2473, %vm2474
      %v2476 = vsel %vm2475, %v2468, %v2472
      %v2477 = vand.u32 2147483647, %v2167
      %vm2478 = vcmp.eq.f32.partialorder %v2477, 8.507059e+37
      %v2479 = vand.u32 %v2167, 2147483648
      %v2480 = vor.u32 1.1754944e-38, %v2479
      %v2481 = vsel %vm2478, %v2480, %v2476
      %v2482 = vmul.f32 1.0, %v2481
      %v2483 = vrcp.pop %v2168
      %v2484 = vmul.f32 %v2168, %v2483
      %v2485 = vsub.f32 1.0, %v2484
      %v2486 = vmul.f32 %v2483, %v2485
      %v2487 = vadd.f32 %v2483, %v2486
      %vm2488 = vweird.f32 %v2168
      %vm2489 = vweird.f32 %v2483
      %vm2490 = vmor %vm2488, %vm2489
      %v2491 = vsel %vm2490, %v2483, %v2487
      %v2492 = vand.u32 2147483647, %v2168
      %vm2493 = vcmp.eq.f32.partialorder %v2492, 8.507059e+37
      %v2494 = vand.u32 %v2168, 2147483648
      %v2495 = vor.u32 1.1754944e-38, %v2494
      %v2496 = vsel %vm2493, %v2495, %v2491
      %v2497 = vmul.f32 1.0, %v2496
      %v2498 = vrcp.pop %v2169
      %v2499 = vmul.f32 %v2169, %v2498
      %v2500 = vsub.f32 1.0, %v2499
      %v2501 = vmul.f32 %v2498, %v2500
      %v2502 = vadd.f32 %v2498, %v2501
      %vm2503 = vweird.f32 %v2169
      %vm2504 = vweird.f32 %v2498
      %vm2505 = vmor %vm2503, %vm2504
      %v2506 = vsel %vm2505, %v2498, %v2502
      %v2507 = vand.u32 2147483647, %v2169
      %vm2508 = vcmp.eq.f32.partialorder %v2507, 8.507059e+37
      %v2509 = vand.u32 %v2169, 2147483648
      %v2510 = vor.u32 1.1754944e-38, %v2509
      %v2511 = vsel %vm2508, %v2510, %v2506
      %v2512 = vmul.f32 1.0, %v2511
      %v2513 = vrcp.pop %v2170
      %v2514 = vmul.f32 %v2170, %v2513
      %v2515 = vsub.f32 1.0, %v2514
      %v2516 = vmul.f32 %v2513, %v2515
      %v2517 = vadd.f32 %v2513, %v2516
      %vm2518 = vweird.f32 %v2170
      %vm2519 = vweird.f32 %v2513
      %vm2520 = vmor %vm2518, %vm2519
      %v2521 = vsel %vm2520, %v2513, %v2517
      %v2522 = vand.u32 2147483647, %v2170
      %vm2523 = vcmp.eq.f32.partialorder %v2522, 8.507059e+37
      %v2524 = vand.u32 %v2170, 2147483648
      %v2525 = vor.u32 1.1754944e-38, %v2524
      %v2526 = vsel %vm2523, %v2525, %v2521
      %v2527 = vmul.f32 1.0, %v2526
      %v2528 = vrcp.pop %v2171
      %v2529 = vmul.f32 %v2171, %v2528
      %v2530 = vsub.f32 1.0, %v2529
      %v2531 = vmul.f32 %v2528, %v2530
      %v2532 = vadd.f32 %v2528, %v2531
      %vm2533 = vweird.f32 %v2171
      %vm2534 = vweird.f32 %v2528
      %vm2535 = vmor %vm2533, %vm2534
      %v2536 = vsel %vm2535, %v2528, %v2532
      %v2537 = vand.u32 2147483647, %v2171
      %vm2538 = vcmp.eq.f32.partialorder %v2537, 8.507059e+37
      %v2539 = vand.u32 %v2171, 2147483648
      %v2540 = vor.u32 1.1754944e-38, %v2539
      %v2541 = vsel %vm2538, %v2540, %v2536
      %v2542 = vmul.f32 1.0, %v2541
      %v2543 = vrcp.pop %v2172
      %v2544 = vmul.f32 %v2172, %v2543
      %v2545 = vsub.f32 1.0, %v2544
      %v2546 = vmul.f32 %v2543, %v2545
      %v2547 = vadd.f32 %v2543, %v2546
      %vm2548 = vweird.f32 %v2172
      %vm2549 = vweird.f32 %v2543
      %vm2550 = vmor %vm2548, %vm2549
      %v2551 = vsel %vm2550, %v2543, %v2547
      %v2552 = vand.u32 2147483647, %v2172
      %vm2553 = vcmp.eq.f32.partialorder %v2552, 8.507059e+37
      %v2554 = vand.u32 %v2172, 2147483648
      %v2555 = vor.u32 1.1754944e-38, %v2554
      %v2556 = vsel %vm2553, %v2555, %v2551
      %v2557 = vmul.f32 1.0, %v2556
      %v2558 = vrcp.pop %v2173
      %v2559 = vmul.f32 %v2173, %v2558
      %v2560 = vsub.f32 1.0, %v2559
      %v2561 = vmul.f32 %v2558, %v2560
      %v2562 = vadd.f32 %v2558, %v2561
      %vm2563 = vweird.f32 %v2173
      %vm2564 = vweird.f32 %v2558
      %vm2565 = vmor %vm2563, %vm2564
      %v2566 = vsel %vm2565, %v2558, %v2562
      %v2567 = vand.u32 2147483647, %v2173
      %vm2568 = vcmp.eq.f32.partialorder %v2567, 8.507059e+37
      %v2569 = vand.u32 %v2173, 2147483648
      %v2570 = vor.u32 1.1754944e-38, %v2569
      %v2571 = vsel %vm2568, %v2570, %v2566
      %v2572 = vmul.f32 1.0, %v2571
      %v2573 = vrcp.pop %v2174
      %v2574 = vmul.f32 %v2174, %v2573
      %v2575 = vsub.f32 1.0, %v2574
      %v2576 = vmul.f32 %v2573, %v2575
      %v2577 = vadd.f32 %v2573, %v2576
      %vm2578 = vweird.f32 %v2174
      %vm2579 = vweird.f32 %v2573
      %vm2580 = vmor %vm2578, %vm2579
      %v2581 = vsel %vm2580, %v2573, %v2577
      %v2582 = vand.u32 2147483647, %v2174
      %vm2583 = vcmp.eq.f32.partialorder %v2582, 8.507059e+37
      %v2584 = vand.u32 %v2174, 2147483648
      %v2585 = vor.u32 1.1754944e-38, %v2584
      %v2586 = vsel %vm2583, %v2585, %v2581
      %v2587 = vmul.f32 1.0, %v2586
      %v2588 = vrcp.pop %v2175
      %v2589 = vmul.f32 %v2175, %v2588
      %v2590 = vsub.f32 1.0, %v2589
      %v2591 = vmul.f32 %v2588, %v2590
      %v2592 = vadd.f32 %v2588, %v2591
      %vm2593 = vweird.f32 %v2175
      %vm2594 = vweird.f32 %v2588
      %vm2595 = vmor %vm2593, %vm2594
      %v2596 = vsel %vm2595, %v2588, %v2592
      %v2597 = vand.u32 2147483647, %v2175
      %vm2598 = vcmp.eq.f32.partialorder %v2597, 8.507059e+37
      %v2599 = vand.u32 %v2175, 2147483648
      %v2600 = vor.u32 1.1754944e-38, %v2599
      %v2601 = vsel %vm2598, %v2600, %v2596
      %v2602 = vmul.f32 1.0, %v2601
      %v2603 = vrcp.pop %v2176
      %v2604 = vmul.f32 %v2176, %v2603
      %v2605 = vsub.f32 1.0, %v2604
      %v2606 = vmul.f32 %v2603, %v2605
      %v2607 = vadd.f32 %v2603, %v2606
      %vm2608 = vweird.f32 %v2176
      %vm2609 = vweird.f32 %v2603
      %vm2610 = vmor %vm2608, %vm2609
      %v2611 = vsel %vm2610, %v2603, %v2607
      %v2612 = vand.u32 2147483647, %v2176
      %vm2613 = vcmp.eq.f32.partialorder %v2612, 8.507059e+37
      %v2614 = vand.u32 %v2176, 2147483648
      %v2615 = vor.u32 1.1754944e-38, %v2614
      %v2616 = vsel %vm2613, %v2615, %v2611
      %v2617 = vmul.f32 1.0, %v2616
      %v2618 = vrcp.pop %v2177
      %v2619 = vmul.f32 %v2177, %v2618
      %v2620 = vsub.f32 1.0, %v2619
      %v2621 = vmul.f32 %v2618, %v2620
      %v2622 = vadd.f32 %v2618, %v2621
      %vm2623 = vweird.f32 %v2177
      %vm2624 = vweird.f32 %v2618
      %vm2625 = vmor %vm2623, %vm2624
      %v2626 = vsel %vm2625, %v2618, %v2622
      %v2627 = vand.u32 2147483647, %v2177
      %vm2628 = vcmp.eq.f32.partialorder %v2627, 8.507059e+37
      %v2629 = vand.u32 %v2177, 2147483648
      %v2630 = vor.u32 1.1754944e-38, %v2629
      %v2631 = vsel %vm2628, %v2630, %v2626
      %v2632 = vmul.f32 1.0, %v2631
      %v2633 = vrcp.pop %v2178
      %v2634 = vmul.f32 %v2178, %v2633
      %v2635 = vsub.f32 1.0, %v2634
      %v2636 = vmul.f32 %v2633, %v2635
      %v2637 = vadd.f32 %v2633, %v2636
      %vm2638 = vweird.f32 %v2178
      %vm2639 = vweird.f32 %v2633
      %vm2640 = vmor %vm2638, %vm2639
      %v2641 = vsel %vm2640, %v2633, %v2637
      %v2642 = vand.u32 2147483647, %v2178
      %vm2643 = vcmp.eq.f32.partialorder %v2642, 8.507059e+37
      %v2644 = vand.u32 %v2178, 2147483648
      %v2645 = vor.u32 1.1754944e-38, %v2644
      %v2646 = vsel %vm2643, %v2645, %v2641
      %v2647 = vmul.f32 1.0, %v2646
      %v2648 = vrcp.pop %v2179
      %v2649 = vmul.f32 %v2179, %v2648
      %v2650 = vsub.f32 1.0, %v2649
      %v2651 = vmul.f32 %v2648, %v2650
      %v2652 = vadd.f32 %v2648, %v2651
      %vm2653 = vweird.f32 %v2179
      %vm2654 = vweird.f32 %v2648
      %vm2655 = vmor %vm2653, %vm2654
      %v2656 = vsel %vm2655, %v2648, %v2652
      %v2657 = vand.u32 2147483647, %v2179
      %vm2658 = vcmp.eq.f32.partialorder %v2657, 8.507059e+37
      %v2659 = vand.u32 %v2179, 2147483648
      %v2660 = vor.u32 1.1754944e-38, %v2659
      %v2661 = vsel %vm2658, %v2660, %v2656
      %v2662 = vmul.f32 1.0, %v2661
      %v2663 = vrcp.pop %v2180
      %v2664 = vmul.f32 %v2180, %v2663
      %v2665 = vsub.f32 1.0, %v2664
      %v2666 = vmul.f32 %v2663, %v2665
      %v2667 = vadd.f32 %v2663, %v2666
      %vm2668 = vweird.f32 %v2180
      %vm2669 = vweird.f32 %v2663
      %vm2670 = vmor %vm2668, %vm2669
      %v2671 = vsel %vm2670, %v2663, %v2667
      %v2672 = vand.u32 2147483647, %v2180
      %vm2673 = vcmp.eq.f32.partialorder %v2672, 8.507059e+37
      %v2674 = vand.u32 %v2180, 2147483648
      %v2675 = vor.u32 1.1754944e-38, %v2674
      %v2676 = vsel %vm2673, %v2675, %v2671
      %v2677 = vmul.f32 1.0, %v2676
      %v2678 = vrcp.pop %v2181
      %v2679 = vmul.f32 %v2181, %v2678
      %v2680 = vsub.f32 1.0, %v2679
      %v2681 = vmul.f32 %v2678, %v2680
      %v2682 = vadd.f32 %v2678, %v2681
      %vm2683 = vweird.f32 %v2181
      %vm2684 = vweird.f32 %v2678
      %vm2685 = vmor %vm2683, %vm2684
      %v2686 = vsel %vm2685, %v2678, %v2682
      %v2687 = vand.u32 2147483647, %v2181
      %vm2688 = vcmp.eq.f32.partialorder %v2687, 8.507059e+37
      %v2689 = vand.u32 %v2181, 2147483648
      %v2690 = vor.u32 1.1754944e-38, %v2689
      %v2691 = vsel %vm2688, %v2690, %v2686
      %v2692 = vmul.f32 1.0, %v2691
      %v2693 = vrcp.pop %v2182
      %v2694 = vmul.f32 %v2182, %v2693
      %v2695 = vsub.f32 1.0, %v2694
      %v2696 = vmul.f32 %v2693, %v2695
      %v2697 = vadd.f32 %v2693, %v2696
      %vm2698 = vweird.f32 %v2182
      %vm2699 = vweird.f32 %v2693
      %vm2700 = vmor %vm2698, %vm2699
      %v2701 = vsel %vm2700, %v2693, %v2697
      %v2702 = vand.u32 2147483647, %v2182
      %vm2703 = vcmp.eq.f32.partialorder %v2702, 8.507059e+37
      %v2704 = vand.u32 %v2182, 2147483648
      %v2705 = vor.u32 1.1754944e-38, %v2704
      %v2706 = vsel %vm2703, %v2705, %v2701
      %v2707 = vmul.f32 1.0, %v2706
      %v2708 = vrcp.pop %v2183
      %v2709 = vmul.f32 %v2183, %v2708
      %v2710 = vsub.f32 1.0, %v2709
      %v2711 = vmul.f32 %v2708, %v2710
      %v2712 = vadd.f32 %v2708, %v2711
      %vm2713 = vweird.f32 %v2183
      %vm2714 = vweird.f32 %v2708
      %vm2715 = vmor %vm2713, %vm2714
      %v2716 = vsel %vm2715, %v2708, %v2712
      %v2717 = vand.u32 2147483647, %v2183
      %vm2718 = vcmp.eq.f32.partialorder %v2717, 8.507059e+37
      %v2719 = vand.u32 %v2183, 2147483648
      %v2720 = vor.u32 1.1754944e-38, %v2719
      %v2721 = vsel %vm2718, %v2720, %v2716
      %v2722 = vmul.f32 1.0, %v2721
      %v2723 = vrcp.pop %v2184
      %v2724 = vmul.f32 %v2184, %v2723
      %v2725 = vsub.f32 1.0, %v2724
      %v2726 = vmul.f32 %v2723, %v2725
      %v2727 = vadd.f32 %v2723, %v2726
      %vm2728 = vweird.f32 %v2184
      %vm2729 = vweird.f32 %v2723
      %vm2730 = vmor %vm2728, %vm2729
      %v2731 = vsel %vm2730, %v2723, %v2727
      %v2732 = vand.u32 2147483647, %v2184
      %vm2733 = vcmp.eq.f32.partialorder %v2732, 8.507059e+37
      %v2734 = vand.u32 %v2184, 2147483648
      %v2735 = vor.u32 1.1754944e-38, %v2734
      %v2736 = vsel %vm2733, %v2735, %v2731
      %v2737 = vmul.f32 1.0, %v2736
      %v2738 = vrcp.pop %v2185
      %v2739 = vmul.f32 %v2185, %v2738
      %v2740 = vsub.f32 1.0, %v2739
      %v2741 = vmul.f32 %v2738, %v2740
      %v2742 = vadd.f32 %v2738, %v2741
      %vm2743 = vweird.f32 %v2185
      %vm2744 = vweird.f32 %v2738
      %vm2745 = vmor %vm2743, %vm2744
      %v2746 = vsel %vm2745, %v2738, %v2742
      %v2747 = vand.u32 2147483647, %v2185
      %vm2748 = vcmp.eq.f32.partialorder %v2747, 8.507059e+37
      %v2749 = vand.u32 %v2185, 2147483648
      %v2750 = vor.u32 1.1754944e-38, %v2749
      %v2751 = vsel %vm2748, %v2750, %v2746
      %v2752 = vmul.f32 1.0, %v2751
      %v2753 = vrcp.pop %v2186
      %v2754 = vmul.f32 %v2186, %v2753
      %v2755 = vsub.f32 1.0, %v2754
      %v2756 = vmul.f32 %v2753, %v2755
      %v2757 = vadd.f32 %v2753, %v2756
      %vm2758 = vweird.f32 %v2186
      %vm2759 = vweird.f32 %v2753
      %vm2760 = vmor %vm2758, %vm2759
      %v2761 = vsel %vm2760, %v2753, %v2757
      %v2762 = vand.u32 2147483647, %v2186
      %vm2763 = vcmp.eq.f32.partialorder %v2762, 8.507059e+37
      %v2764 = vand.u32 %v2186, 2147483648
      %v2765 = vor.u32 1.1754944e-38, %v2764
      %v2766 = vsel %vm2763, %v2765, %v2761
      %v2767 = vmul.f32 1.0, %v2766
      %v2768 = vrcp.pop %v2187
      %v2769 = vmul.f32 %v2187, %v2768
      %v2770 = vsub.f32 1.0, %v2769
      %v2771 = vmul.f32 %v2768, %v2770
      %v2772 = vadd.f32 %v2768, %v2771
      %vm2773 = vweird.f32 %v2187
      %vm2774 = vweird.f32 %v2768
      %vm2775 = vmor %vm2773, %vm2774
      %v2776 = vsel %vm2775, %v2768, %v2772
      %v2777 = vand.u32 2147483647, %v2187
      %vm2778 = vcmp.eq.f32.partialorder %v2777, 8.507059e+37
      %v2779 = vand.u32 %v2187, 2147483648
      %v2780 = vor.u32 1.1754944e-38, %v2779
      %v2781 = vsel %vm2778, %v2780, %v2776
      %v2782 = vmul.f32 1.0, %v2781
      %v2783 = vrcp.pop %v2188
      %v2784 = vmul.f32 %v2188, %v2783
      %v2785 = vsub.f32 1.0, %v2784
      %v2786 = vmul.f32 %v2783, %v2785
      %v2787 = vadd.f32 %v2783, %v2786
      %vm2788 = vweird.f32 %v2188
      %vm2789 = vweird.f32 %v2783
      %vm2790 = vmor %vm2788, %vm2789
      %v2791 = vsel %vm2790, %v2783, %v2787
      %v2792 = vand.u32 2147483647, %v2188
      %vm2793 = vcmp.eq.f32.partialorder %v2792, 8.507059e+37
      %v2794 = vand.u32 %v2188, 2147483648
      %v2795 = vor.u32 1.1754944e-38, %v2794
      %v2796 = vsel %vm2793, %v2795, %v2791
      %v2797 = vmul.f32 1.0, %v2796
      %v2798 = vrcp.pop %v2189
      %v2799 = vmul.f32 %v2189, %v2798
      %v2800 = vsub.f32 1.0, %v2799
      %v2801 = vmul.f32 %v2798, %v2800
      %v2802 = vadd.f32 %v2798, %v2801
      %vm2803 = vweird.f32 %v2189
      %vm2804 = vweird.f32 %v2798
      %vm2805 = vmor %vm2803, %vm2804
      %v2806 = vsel %vm2805, %v2798, %v2802
      %v2807 = vand.u32 2147483647, %v2189
      %vm2808 = vcmp.eq.f32.partialorder %v2807, 8.507059e+37
      %v2809 = vand.u32 %v2189, 2147483648
      %v2810 = vor.u32 1.1754944e-38, %v2809
      %v2811 = vsel %vm2808, %v2810, %v2806
      %v2812 = vmul.f32 1.0, %v2811
      %v2813 = vrcp.pop %v2190
      %v2814 = vmul.f32 %v2190, %v2813
      %v2815 = vsub.f32 1.0, %v2814
      %v2816 = vmul.f32 %v2813, %v2815
      %v2817 = vadd.f32 %v2813, %v2816
      %vm2818 = vweird.f32 %v2190
      %vm2819 = vweird.f32 %v2813
      %vm2820 = vmor %vm2818, %vm2819
      %v2821 = vsel %vm2820, %v2813, %v2817
      %v2822 = vand.u32 2147483647, %v2190
      %vm2823 = vcmp.eq.f32.partialorder %v2822, 8.507059e+37
      %v2824 = vand.u32 %v2190, 2147483648
      %v2825 = vor.u32 1.1754944e-38, %v2824
      %v2826 = vsel %vm2823, %v2825, %v2821
      %v2827 = vmul.f32 1.0, %v2826
      %v2828 = vrcp.pop %v2191
      %v2829 = vmul.f32 %v2191, %v2828
      %v2830 = vsub.f32 1.0, %v2829
      %v2831 = vmul.f32 %v2828, %v2830
      %v2832 = vadd.f32 %v2828, %v2831
      %vm2833 = vweird.f32 %v2191
      %vm2834 = vweird.f32 %v2828
      %vm2835 = vmor %vm2833, %vm2834
      %v2836 = vsel %vm2835, %v2828, %v2832
      %v2837 = vand.u32 2147483647, %v2191
      %vm2838 = vcmp.eq.f32.partialorder %v2837, 8.507059e+37
      %v2839 = vand.u32 %v2191, 2147483648
      %v2840 = vor.u32 1.1754944e-38, %v2839
      %v2841 = vsel %vm2838, %v2840, %v2836
      %v2842 = vmul.f32 1.0, %v2841
      %v2843 = vrcp.pop %v2192
      %v2844 = vmul.f32 %v2192, %v2843
      %v2845 = vsub.f32 1.0, %v2844
      %v2846 = vmul.f32 %v2843, %v2845
      %v2847 = vadd.f32 %v2843, %v2846
      %vm2848 = vweird.f32 %v2192
      %vm2849 = vweird.f32 %v2843
      %vm2850 = vmor %vm2848, %vm2849
      %v2851 = vsel %vm2850, %v2843, %v2847
      %v2852 = vand.u32 2147483647, %v2192
      %vm2853 = vcmp.eq.f32.partialorder %v2852, 8.507059e+37
      %v2854 = vand.u32 %v2192, 2147483648
      %v2855 = vor.u32 1.1754944e-38, %v2854
      %v2856 = vsel %vm2853, %v2855, %v2851
      %v2857 = vmul.f32 1.0, %v2856
      %v2858 = vrcp.pop %v2193
      %v2859 = vmul.f32 %v2193, %v2858
      %v2860 = vsub.f32 1.0, %v2859
      %v2861 = vmul.f32 %v2858, %v2860
      %v2862 = vadd.f32 %v2858, %v2861
      %vm2863 = vweird.f32 %v2193
      %vm2864 = vweird.f32 %v2858
      %vm2865 = vmor %vm2863, %vm2864
      %v2866 = vsel %vm2865, %v2858, %v2862
      %v2867 = vand.u32 2147483647, %v2193
      %vm2868 = vcmp.eq.f32.partialorder %v2867, 8.507059e+37
      %v2869 = vand.u32 %v2193, 2147483648
      %v2870 = vor.u32 1.1754944e-38, %v2869
      %v2871 = vsel %vm2868, %v2870, %v2866
      %v2872 = vmul.f32 1.0, %v2871
      %v2873 = vrcp.pop %v2194
      %v2874 = vmul.f32 %v2194, %v2873
      %v2875 = vsub.f32 1.0, %v2874
      %v2876 = vmul.f32 %v2873, %v2875
      %v2877 = vadd.f32 %v2873, %v2876
      %vm2878 = vweird.f32 %v2194
      %vm2879 = vweird.f32 %v2873
      %vm2880 = vmor %vm2878, %vm2879
      %v2881 = vsel %vm2880, %v2873, %v2877
      %v2882 = vand.u32 2147483647, %v2194
      %vm2883 = vcmp.eq.f32.partialorder %v2882, 8.507059e+37
      %v2884 = vand.u32 %v2194, 2147483648
      %v2885 = vor.u32 1.1754944e-38, %v2884
      %v2886 = vsel %vm2883, %v2885, %v2881
      %v2887 = vmul.f32 1.0, %v2886
      %v2888 = vrcp.pop %v2195
      %v2889 = vmul.f32 %v2195, %v2888
      %v2890 = vsub.f32 1.0, %v2889
      %v2891 = vmul.f32 %v2888, %v2890
      %v2892 = vadd.f32 %v2888, %v2891
      %vm2893 = vweird.f32 %v2195
      %vm2894 = vweird.f32 %v2888
      %vm2895 = vmor %vm2893, %vm2894
      %v2896 = vsel %vm2895, %v2888, %v2892
      %v2897 = vand.u32 2147483647, %v2195
      %vm2898 = vcmp.eq.f32.partialorder %v2897, 8.507059e+37
      %v2899 = vand.u32 %v2195, 2147483648
      %v2900 = vor.u32 1.1754944e-38, %v2899
      %v2901 = vsel %vm2898, %v2900, %v2896
      %v2902 = vmul.f32 1.0, %v2901
      %v2903 = vrcp.pop %v2196
      %v2904 = vmul.f32 %v2196, %v2903
      %v2905 = vsub.f32 1.0, %v2904
      %v2906 = vmul.f32 %v2903, %v2905
      %v2907 = vadd.f32 %v2903, %v2906
      %vm2908 = vweird.f32 %v2196
      %vm2909 = vweird.f32 %v2903
      %vm2910 = vmor %vm2908, %vm2909
      %v2911 = vsel %vm2910, %v2903, %v2907
      %v2912 = vand.u32 2147483647, %v2196
      %vm2913 = vcmp.eq.f32.partialorder %v2912, 8.507059e+37
      %v2914 = vand.u32 %v2196, 2147483648
      %v2915 = vor.u32 1.1754944e-38, %v2914
      %v2916 = vsel %vm2913, %v2915, %v2911
      %v2917 = vmul.f32 1.0, %v2916
      %v2918 = vrcp.pop %v2197
      %v2919 = vmul.f32 %v2197, %v2918
      %v2920 = vsub.f32 1.0, %v2919
      %v2921 = vmul.f32 %v2918, %v2920
      %v2922 = vadd.f32 %v2918, %v2921
      %vm2923 = vweird.f32 %v2197
      %vm2924 = vweird.f32 %v2918
      %vm2925 = vmor %vm2923, %vm2924
      %v2926 = vsel %vm2925, %v2918, %v2922
      %v2927 = vand.u32 2147483647, %v2197
      %vm2928 = vcmp.eq.f32.partialorder %v2927, 8.507059e+37
      %v2929 = vand.u32 %v2197, 2147483648
      %v2930 = vor.u32 1.1754944e-38, %v2929
      %v2931 = vsel %vm2928, %v2930, %v2926
      %v2932 = vmul.f32 1.0, %v2931
      %2933 = vst [vmem:[%s228] sm:$0xff] %v2212
      %2934 = vst [vmem:[%s228 + $0x8] sm:$0xff] %v2227
      %2935 = vst [vmem:[%s228 + $0x10] sm:$0xff] %v2242
      %2936 = vst [vmem:[%s228 + $0x18] sm:$0xff] %v2257
      %2937 = vst [vmem:[%s228 + $0x20] sm:$0xff] %v2272
      %2938 = vst [vmem:[%s228 + $0x28] sm:$0xff] %v2287
      %vm2939 = vcmask 130048
      %2940 = vst.msk [vmem:[%s228 + $0x30] sm:$0xff] %vm2939, %v2302
      %2941 = vst [vmem:[%s228 + $0x38] sm:$0xff] %v2317
      %2942 = vst [vmem:[%s228 + $0x40] sm:$0xff] %v2332
      %2943 = vst [vmem:[%s228 + $0x48] sm:$0xff] %v2347
      %2944 = vst [vmem:[%s228 + $0x50] sm:$0xff] %v2362
      %2945 = vst [vmem:[%s228 + $0x58] sm:$0xff] %v2377
      %2946 = vst [vmem:[%s228 + $0x60] sm:$0xff] %v2392
      %2947 = vst.msk [vmem:[%s228 + $0x68] sm:$0xff] %vm2939, %v2407
      %2948 = vst [vmem:[%s228 + $0x70] sm:$0xff] %v2422
      %2949 = vst [vmem:[%s228 + $0x78] sm:$0xff] %v2437
      %2950 = vst [vmem:[%s228 + $0x80] sm:$0xff] %v2452
      %2951 = vst [vmem:[%s228 + $0x88] sm:$0xff] %v2467
      %2952 = vst [vmem:[%s228 + $0x90] sm:$0xff] %v2482
      %2953 = vst [vmem:[%s228 + $0x98] sm:$0xff] %v2497
      %2954 = vst.msk [vmem:[%s228 + $0xa0] sm:$0xff] %vm2939, %v2512
      %2955 = vst [vmem:[%s228 + $0xa8] sm:$0xff] %v2527
      %2956 = vst [vmem:[%s228 + $0xb0] sm:$0xff] %v2542
      %2957 = vst [vmem:[%s228 + $0xb8] sm:$0xff] %v2557
      %2958 = vst [vmem:[%s228 + $0xc0] sm:$0xff] %v2572
      %2959 = vst [vmem:[%s228 + $0xc8] sm:$0xff] %v2587
      %2960 = vst [vmem:[%s228 + $0xd0] sm:$0xff] %v2602
      %2961 = vst.msk [vmem:[%s228 + $0xd8] sm:$0xff] %vm2939, %v2617
      %2962 = vst [vmem:[%s228 + $0xe0] sm:$0xff] %v2632
      %2963 = vst [vmem:[%s228 + $0xe8] sm:$0xff] %v2647
      %2964 = vst [vmem:[%s228 + $0xf0] sm:$0xff] %v2662
      %2965 = vst [vmem:[%s228 + $0xf8] sm:$0xff] %v2677
      %2966 = vst [vmem:[%s228 + $0x100] sm:$0xff] %v2692
      %2967 = vst [vmem:[%s228 + $0x108] sm:$0xff] %v2707
      %2968 = vst.msk [vmem:[%s228 + $0x110] sm:$0xff] %vm2939, %v2722
      %2969 = vst [vmem:[%s228 + $0x118] sm:$0xff] %v2737
      %2970 = vst [vmem:[%s228 + $0x120] sm:$0xff] %v2752
      %2971 = vst [vmem:[%s228 + $0x128] sm:$0xff] %v2767
      %2972 = vst [vmem:[%s228 + $0x130] sm:$0xff] %v2782
      %2973 = vst [vmem:[%s228 + $0x138] sm:$0xff] %v2797
      %2974 = vst [vmem:[%s228 + $0x140] sm:$0xff] %v2812
      %2975 = vst.msk [vmem:[%s228 + $0x148] sm:$0xff] %vm2939, %v2827
      %2976 = vst [vmem:[%s228 + $0x150] sm:$0xff] %v2842
      %2977 = vst [vmem:[%s228 + $0x158] sm:$0xff] %v2857
      %2978 = vst [vmem:[%s228 + $0x160] sm:$0xff] %v2872
      %2979 = vst [vmem:[%s228 + $0x168] sm:$0xff] %v2887
      %2980 = vst [vmem:[%s228 + $0x170] sm:$0xff] %v2902
      %2981 = vst [vmem:[%s228 + $0x178] sm:$0xff] %v2917
      %2982 = vst.msk [vmem:[%s228 + $0x180] sm:$0xff] %vm2939, %v2932
      %s2983 = smul.u32 7, %s16
      %p2984 = scmp.lt.s32.totalorder %s2983, 13
      %s2985 = scalar_select %p2984, %s2983, 13
      %s2986 = smul.addr %s2985, 7
      %s2987 = smul.addr %s2986, 8
      %s2988 = scalar_lea.vmem %s5, %s2987
      // Predicated region
      $region41: #{decoder_forward.1} parent=39 // pred_check
        %p2989 = pneg %p144
      $region42: #{decoder_forward.1} parent=39 // pred_check_branch
        %2991 = sbr.rel (%p2989) target = $region44
      $region43: #{decoder_forward.1} parent=39 // pred_region
        %s2992 = smul.u32 7, %s16
      $region44: #{decoder_forward.1} parent=39 // pred_fallthru
        _
    $region40: #{decoder_forward.1} parent=5 // pred_fallthru
      _
    %p2993 = scmp.le.s32.totalorder 2, %s11
    // Predicated region
    $region45: #{decoder_forward.1} parent=5 // pred_check
      %p2994 = pneg %p2993
    $region46: #{decoder_forward.1} parent=5 // pred_check_branch
      %2996 = sbr.rel (%p2994) target = $region48
    $region47: #{decoder_forward.1} parent=5 // pred_region
      %s2997 = ssub.s32 %s11, 2
      // Predicated region
      $region49: #{decoder_forward.1} parent=47 // pred_check
        %p2998 = pneg %p150
      $region50: #{decoder_forward.1} parent=47 // pred_check_branch
        %3000 = sbr.rel (%p2998) target = $region52
      $region51: #{decoder_forward.1} parent=47 // pred_region
        %s3001 = smul.u32 7, %s17
        %p3002 = scmp.lt.s32.totalorder %s3001, 13
        %s3003 = scalar_select %p3002, %s3001, 13
        %s3004 = smul.addr %s3003, 7
        %s3005 = smul.addr %s3004, 8
        %s3006 = scalar_lea.vmem %s5, %s3005
      $region52: #{decoder_forward.1} parent=47 // pred_fallthru
        _
    $region48: #{decoder_forward.1} parent=5 // pred_fallthru
      _
  $region6: #{decoder_forward.1} parent=0 // loop_footer
    %s15 = sadd.s32 1, %s11
  $region7: #{decoder_forward.1} parent=0 // loop_footer_branch
    %10 = sbr.rel target = $region3
  $region8: #{decoder_forward.1} parent=0 // loop_exit
    _

</llo_original>
